<compile_context>
chip_gen: v5e
topology: v5e:2x2
jax: 0.10.0
libtpu: 0.0.40
codegen_flags: <defaults>
</compile_context>

<pallas_src>
import numpy as np

import jax
import jax.numpy as jnp
from jax.experimental import pallas as pl
from jax.experimental.pallas import tpu as pltpu

SEQ_LEN = 8
DIM_AUD = 64
CONV_CHANNELS = [DIM_AUD, 16, 8, 4, 2, 1]
LEAKY_SLOPE = 0.02

BLOCK_B = 128                  # windows per grid step
C_PAD = 16                     # padded channel width of every conv layer output
H_LANES = SEQ_LEN * C_PAD      # 128: lane width of hidden activations
X_LANES = SEQ_LEN * DIM_AUD    # 512: lane width of the flattened input window

# Row offsets inside the packed parameter buffer conv_buf: [CONV_BUF_ROWS, 128].
OFF_W1 = 0                         # [T*D, H_LANES]   banded conv layer 1
OFF_W2 = OFF_W1 + X_LANES          # 4 x [H_LANES, H_LANES] banded conv layers 2..5
OFF_BIAS = OFF_W2 + 4 * H_LANES    # 8-row block; row i = per-time-step bias of layer i
OFF_WL = OFF_BIAS + 8              # [H_LANES, T] attention Linear weight (lanes 0..T-1)
OFF_LB = OFF_WL + H_LANES          # 8-row block; row 0, lanes 0..T-1 = Linear bias
CONV_BUF_ROWS = OFF_LB + 8         # 1168 rows x 128 lanes ~= 584 KiB f32


# ---------------------------------------------------------------------------
# Kernel
# ---------------------------------------------------------------------------
def _audio_att_kernel(x_ref, cw_ref, r_ref, s_ref, o_ref):
    T = SEQ_LEN
    x = x_ref[...]                                           # [BB, T*D] f32

    bias_blk = cw_ref[OFF_BIAS:OFF_BIAS + 8, :]              # [8, H_LANES]

    def conv_layer(h, w, bias_row):
        # Banded conv-as-matmul over the whole window + bias + LeakyReLU(0.02).
        y = jnp.dot(h, w, preferred_element_type=jnp.float32) + bias_row
        return jnp.where(y >= 0.0, y, LEAKY_SLOPE * y)

    # ---- conv trunk (5 layers, each one MXU matmul over all BB windows) -----
    h = conv_layer(x, cw_ref[OFF_W1:OFF_W1 + X_LANES, :], bias_blk[0:1, :])
    for li in range(1, 5):
        w = cw_ref[OFF_W2 + (li - 1) * H_LANES:OFF_W2 + li * H_LANES, :]
        h = conv_layer(h, w, bias_blk[li:li + 1, :])
    # h: [BB, H_LANES]; lane t*C_PAD holds the conv output s[b, t], others are 0.

    # ---- attention head (O(T^2) weights, independent of BLOCK_B) ------------
    wl = cw_ref[OFF_WL:OFF_WL + H_LANES, 0:T]                # [H_LANES, T]
    lb = cw_ref[OFF_LB:OFF_LB + 1, 0:T]                      # [1, T]
    logits = jnp.dot(h, wl, preferred_element_type=jnp.float32) + lb   # [BB, T]

    m = jnp.max(logits, axis=-1, keepdims=True)
    e = jnp.exp(logits - m)
    att = e / jnp.sum(e, axis=-1, keepdims=True)             # [BB, T] softmax per window

    # out[b, d] = sum_t att[b, t] * x[b, t, d]:
    #   expand att across D with R ([T, T*D]), multiply x, fold with S ([T*D, D]).
    att_x = jnp.dot(att, r_ref[...], preferred_element_type=jnp.float32) * x
    o_ref[...] = jnp.dot(att_x, s_ref[...], preferred_element_type=jnp.float32)


# ---------------------------------------------------------------------------
# Host-side parameter packing (done ONCE, outside the per-call wrapper)
# ---------------------------------------------------------------------------
def pack_params(conv_ws, conv_bs, lw, lb):
    """Pack conv + attention params into 3 kernel-resident buffers."""
    T, D, CP = SEQ_LEN, DIM_AUD, C_PAD
    cw = np.zeros((CONV_BUF_ROWS, H_LANES), np.float32)

    def band(w_np, cin_pad, cout_pad):
        # w_np: [3, cin, cout] (tap k uses input time t_out + k - 1, zero-padded).
        cin, cout = w_np.shape[1], w_np.shape[2]
        W = np.zeros((T * cin_pad, T * cout_pad), np.float32)
        for t_out in range(T):
            for k in range(3):
                t_in = t_out + k - 1
                if 0 <= t_in < T:
                    W[t_in * cin_pad:t_in * cin_pad + cin,
                      t_out * cout_pad:t_out * cout_pad + cout] = w_np[k]
        return W

    cw[OFF_W1:OFF_W1 + X_LANES, :] = band(np.asarray(conv_ws[0], np.float32), D, CP)
    for li in range(1, 5):
        cw[OFF_W2 + (li - 1) * H_LANES:OFF_W2 + li * H_LANES, :] = band(
            np.asarray(conv_ws[li], np.float32), CP, CP)

    for li in range(5):
        cout = CONV_CHANNELS[li + 1]
        b = np.asarray(conv_bs[li], np.float32).reshape(-1)
        for t in range(T):
            cw[OFF_BIAS + li, t * CP:t * CP + cout] = b      # bias at every time step

    lw_np = np.asarray(lw, np.float32)                       # [T, T]
    for t in range(T):
        cw[OFF_WL + t * CP, 0:T] = lw_np[:, t]               # reads s[b, t] at lane t*CP
    cw[OFF_LB, 0:T] = np.asarray(lb, np.float32).reshape(-1)

    # R: repeat each att value across its window's D lanes; S: fold T*D -> D.
    R = np.zeros((T, T * D), np.float32)
    for t in range(T):
        R[t, t * D:(t + 1) * D] = 1.0
    S = np.tile(np.eye(D, dtype=np.float32), (T, 1))         # [T*D, D]

    return jnp.asarray(cw), jnp.asarray(R), jnp.asarray(S)


# ---------------------------------------------------------------------------
# Wrapper (jittable; parameters are pre-packed buffers)
# ---------------------------------------------------------------------------
def audio_att_forward(x, conv_buf, r_buf, s_buf):
    """x: [B, seq_len, dim_aud] (B independent windows) -> [B, dim_aud].

    For B == 1 this matches the PyTorch module's forward ([1, T, D] -> [1, D]).
    """
    x = x.astype(jnp.float32)
    B, T, D = x.shape
    assert T == SEQ_LEN and D == DIM_AUD

    Bp = ((B + BLOCK_B - 1) // BLOCK_B) * BLOCK_B
    xf = x.reshape(B, X_LANES)                               # window-in-lanes layout
    if Bp != B:
        xf = jnp.concatenate([xf, jnp.zeros((Bp - B, X_LANES), jnp.float32)], axis=0)

    out = pl.pallas_call(
        _audio_att_kernel,
        out_shape=jax.ShapeDtypeStruct((Bp, D), jnp.float32),
        grid=(Bp // BLOCK_B,),
        in_specs=[
            pl.BlockSpec((BLOCK_B, X_LANES), lambda g: (g, 0)),
            pl.BlockSpec(conv_buf.shape, lambda g: (0, 0)),  # resident weights
            pl.BlockSpec(r_buf.shape, lambda g: (0, 0)),     # resident expand matrix
            pl.BlockSpec(s_buf.shape, lambda g: (0, 0)),     # resident fold matrix
        ],
        out_specs=pl.BlockSpec((BLOCK_B, D), lambda g: (g, 0)),
        compiler_params=pltpu.CompilerParams(
            dimension_semantics=("parallel",)),
    )(xf, conv_buf, r_buf, s_buf)
    return out[:B]


# ---------------------------------------------------------------------------
# Parameter init + pure-JAX reference
# ---------------------------------------------------------------------------
def init_params(key):
    conv_ws, conv_bs = [], []
    for i in range(5):
        cin, cout = CONV_CHANNELS[i], CONV_CHANNELS[i + 1]
        key, k1, k2 = jax.random.split(key, 3)
        bound = 1.0 / (cin * 3) ** 0.5
        conv_ws.append(jax.random.uniform(k1, (3, cin, cout), jnp.float32, -bound, bound))
        conv_bs.append(jax.random.uniform(k2, (1, cout), jnp.float32, -bound, bound))
    key, k1, k2 = jax.random.split(key, 3)
    bound = 1.0 / SEQ_LEN ** 0.5
    lw = jax.random.uniform(k1, (SEQ_LEN, SEQ_LEN), jnp.float32, -bound, bound)
    lb = jax.random.uniform(k2, (SEQ_LEN, 1), jnp.float32, -bound, bound)
    return conv_ws, conv_bs, lw, lb


def reference_forward(x, conv_ws, conv_bs, lw, lb):
    """Pure-JAX reference matching the PyTorch forward semantics, per window."""
    def one_window(xw):                                      # [T, D]
        h = xw
        for w, b in zip(conv_ws, conv_bs):
            hp = jnp.concatenate([jnp.zeros((1, h.shape[1]), jnp.float32), h[:-1]], axis=0)
            hn = jnp.concatenate([h[1:], jnp.zeros((1, h.shape[1]), jnp.float32)], axis=0)
            y = hp @ w[0] + h @ w[1] + hn @ w[2] + b
            h = jnp.where(y >= 0, y, LEAKY_SLOPE * y)
        logits = lw @ h + lb                                 # [T, 1]
        att = jax.nn.softmax(logits, axis=0)
        return jnp.sum(att * xw, axis=0)                     # [D]

    return jax.vmap(one_window)(x.astype(jnp.float32))


if __name__ == "__main__":
    key = jax.random.PRNGKey(0)
    key, xkey, pkey = jax.random.split(key, 3)

    # B=200 -> padded to 256 windows -> 2 grid steps (keeps both v7x cores busy).
    B = 200
    x = jax.random.normal(xkey, (B, SEQ_LEN, DIM_AUD), jnp.float32)
    conv_ws, conv_bs, lw, lb = init_params(pkey)

    # Pack once (host-side); the jitted forward only sees device buffers.
    conv_buf, r_buf, s_buf = pack_params(conv_ws, conv_bs, lw, lb)

    fwd = jax.jit(audio_att_forward)
    out = jax.block_until_ready(fwd(x, conv_buf, r_buf, s_buf))

    ref = reference_forward(x, conv_ws, conv_bs, lw, lb)
    assert out.shape == (B, DIM_AUD)
    max_err = float(jnp.max(jnp.abs(out - ref)))
    assert jnp.allclose(out, ref, atol=1e-3, rtol=1e-3), f"mismatch: max abs err {max_err}"

    print("KERNEL_OK")
</pallas_src>

<mosaic_0001>
module attributes {stable_mosaic.version = 11 : i64} {
  func.func @_audio_att_kernel(%arg0: i32, %arg1: memref<128x512xf32, #tpu.memory_space<vmem>>, %arg2: memref<1168x128xf32, #tpu.memory_space<vmem>>, %arg3: memref<8x512xf32, #tpu.memory_space<vmem>>, %arg4: memref<512x64xf32, #tpu.memory_space<vmem>>, %arg5: memref<128x64xf32, #tpu.memory_space<vmem>>) attributes {dimension_semantics = [#tpu.dimension_semantics<parallel>], iteration_bounds = array<i64: 2>, scalar_prefetch = 0 : i64, scratch_operands = 0 : i64, tpu.core_type = #tpu.core_type<tc>, window_params = [{transform_indices = @transform_0, window_bounds = array<i64: 128, 512>}, {pipeline_mode = #tpu.pipeline_mode<synchronous>, transform_indices = @transform_1, window_bounds = array<i64: 1168, 128>}, {pipeline_mode = #tpu.pipeline_mode<synchronous>, transform_indices = @transform_2, window_bounds = array<i64: 8, 512>}, {pipeline_mode = #tpu.pipeline_mode<synchronous>, transform_indices = @transform_3, window_bounds = array<i64: 512, 64>}, {transform_indices = @transform_4, window_bounds = array<i64: 128, 64>}]} {
    %c0 = arith.constant 0 : index
    %c0_0 = arith.constant 0 : index
    %0 = vector.load %arg1[%c0, %c0_0] : memref<128x512xf32, #tpu.memory_space<vmem>>, vector<128x512xf32>
    %c1024 = arith.constant 1024 : index
    %c0_1 = arith.constant 0 : index
    %1 = vector.load %arg2[%c1024, %c0_1] : memref<1168x128xf32, #tpu.memory_space<vmem>>, vector<8x128xf32>
    %c0_2 = arith.constant 0 : index
    %c0_3 = arith.constant 0 : index
    %2 = vector.load %arg2[%c0_2, %c0_3] : memref<1168x128xf32, #tpu.memory_space<vmem>>, vector<512x128xf32>
    %3 = vector.extract_strided_slice %1 {offsets = [0, 0], sizes = [1, 128], strides = [1, 1]} : vector<8x128xf32> to vector<1x128xf32>
    %cst = arith.constant dense<0.000000e+00> : vector<128x128xf32>
    %4 = tpu.matmul %0, %2, %cst {dimension_numbers = #tpu.dot_dimension_numbers<[1], [0], [0], [1], [0, 0, 1, 1], [], []>} : vector<128x512xf32>, vector<512x128xf32>, vector<128x128xf32> -> vector<128x128xf32>
    %5 = vector.broadcast %3 : vector<1x128xf32> to vector<128x128xf32>
    %6 = arith.addf %4, %5 : vector<128x128xf32>
    %cst_4 = arith.constant 0.000000e+00 : f32
    %7 = vector.broadcast %cst_4 : f32 to vector<128x128xf32>
    %8 = arith.cmpf oge, %6, %7 : vector<128x128xf32>
    %cst_5 = arith.constant 2.000000e-02 : f32
    %9 = vector.broadcast %cst_5 : f32 to vector<128x128xf32>
    %10 = arith.mulf %9, %6 : vector<128x128xf32>
    %11 = arith.select %8, %6, %10 : vector<128x128xi1>, vector<128x128xf32>
    %c512 = arith.constant 512 : index
    %c0_6 = arith.constant 0 : index
    %12 = vector.load %arg2[%c512, %c0_6] : memref<1168x128xf32, #tpu.memory_space<vmem>>, vector<128x128xf32>
    %13 = vector.extract_strided_slice %1 {offsets = [1, 0], sizes = [1, 128], strides = [1, 1]} : vector<8x128xf32> to vector<1x128xf32>
    %cst_7 = arith.constant dense<0.000000e+00> : vector<128x128xf32>
    %14 = tpu.matmul %11, %12, %cst_7 {dimension_numbers = #tpu.dot_dimension_numbers<[1], [0], [0], [1], [0, 0, 1, 1], [], []>} : vector<128x128xf32>, vector<128x128xf32>, vector<128x128xf32> -> vector<128x128xf32>
    %15 = vector.broadcast %13 : vector<1x128xf32> to vector<128x128xf32>
    %16 = arith.addf %14, %15 : vector<128x128xf32>
    %cst_8 = arith.constant 0.000000e+00 : f32
    %17 = vector.broadcast %cst_8 : f32 to vector<128x128xf32>
    %18 = arith.cmpf oge, %16, %17 : vector<128x128xf32>
    %cst_9 = arith.constant 2.000000e-02 : f32
    %19 = vector.broadcast %cst_9 : f32 to vector<128x128xf32>
    %20 = arith.mulf %19, %16 : vector<128x128xf32>
    %21 = arith.select %18, %16, %20 : vector<128x128xi1>, vector<128x128xf32>
    %c640 = arith.constant 640 : index
    %c0_10 = arith.constant 0 : index
    %22 = vector.load %arg2[%c640, %c0_10] : memref<1168x128xf32, #tpu.memory_space<vmem>>, vector<128x128xf32>
    %23 = vector.extract_strided_slice %1 {offsets = [2, 0], sizes = [1, 128], strides = [1, 1]} : vector<8x128xf32> to vector<1x128xf32>
    %cst_11 = arith.constant dense<0.000000e+00> : vector<128x128xf32>
    %24 = tpu.matmul %21, %22, %cst_11 {dimension_numbers = #tpu.dot_dimension_numbers<[1], [0], [0], [1], [0, 0, 1, 1], [], []>} : vector<128x128xf32>, vector<128x128xf32>, vector<128x128xf32> -> vector<128x128xf32>
    %25 = vector.broadcast %23 : vector<1x128xf32> to vector<128x128xf32>
    %26 = arith.addf %24, %25 : vector<128x128xf32>
    %cst_12 = arith.constant 0.000000e+00 : f32
    %27 = vector.broadcast %cst_12 : f32 to vector<128x128xf32>
    %28 = arith.cmpf oge, %26, %27 : vector<128x128xf32>
    %cst_13 = arith.constant 2.000000e-02 : f32
    %29 = vector.broadcast %cst_13 : f32 to vector<128x128xf32>
    %30 = arith.mulf %29, %26 : vector<128x128xf32>
    %31 = arith.select %28, %26, %30 : vector<128x128xi1>, vector<128x128xf32>
    %c768 = arith.constant 768 : index
    %c0_14 = arith.constant 0 : index
    %32 = vector.load %arg2[%c768, %c0_14] : memref<1168x128xf32, #tpu.memory_space<vmem>>, vector<128x128xf32>
    %33 = vector.extract_strided_slice %1 {offsets = [3, 0], sizes = [1, 128], strides = [1, 1]} : vector<8x128xf32> to vector<1x128xf32>
    %cst_15 = arith.constant dense<0.000000e+00> : vector<128x128xf32>
    %34 = tpu.matmul %31, %32, %cst_15 {dimension_numbers = #tpu.dot_dimension_numbers<[1], [0], [0], [1], [0, 0, 1, 1], [], []>} : vector<128x128xf32>, vector<128x128xf32>, vector<128x128xf32> -> vector<128x128xf32>
    %35 = vector.broadcast %33 : vector<1x128xf32> to vector<128x128xf32>
    %36 = arith.addf %34, %35 : vector<128x128xf32>
    %cst_16 = arith.constant 0.000000e+00 : f32
    %37 = vector.broadcast %cst_16 : f32 to vector<128x128xf32>
    %38 = arith.cmpf oge, %36, %37 : vector<128x128xf32>
    %cst_17 = arith.constant 2.000000e-02 : f32
    %39 = vector.broadcast %cst_17 : f32 to vector<128x128xf32>
    %40 = arith.mulf %39, %36 : vector<128x128xf32>
    %41 = arith.select %38, %36, %40 : vector<128x128xi1>, vector<128x128xf32>
    %c896 = arith.constant 896 : index
    %c0_18 = arith.constant 0 : index
    %42 = vector.load %arg2[%c896, %c0_18] : memref<1168x128xf32, #tpu.memory_space<vmem>>, vector<128x128xf32>
    %43 = vector.extract_strided_slice %1 {offsets = [4, 0], sizes = [1, 128], strides = [1, 1]} : vector<8x128xf32> to vector<1x128xf32>
    %cst_19 = arith.constant dense<0.000000e+00> : vector<128x128xf32>
    %44 = tpu.matmul %41, %42, %cst_19 {dimension_numbers = #tpu.dot_dimension_numbers<[1], [0], [0], [1], [0, 0, 1, 1], [], []>} : vector<128x128xf32>, vector<128x128xf32>, vector<128x128xf32> -> vector<128x128xf32>
    %45 = vector.broadcast %43 : vector<1x128xf32> to vector<128x128xf32>
    %46 = arith.addf %44, %45 : vector<128x128xf32>
    %cst_20 = arith.constant 0.000000e+00 : f32
    %47 = vector.broadcast %cst_20 : f32 to vector<128x128xf32>
    %48 = arith.cmpf oge, %46, %47 : vector<128x128xf32>
    %cst_21 = arith.constant 2.000000e-02 : f32
    %49 = vector.broadcast %cst_21 : f32 to vector<128x128xf32>
    %50 = arith.mulf %49, %46 : vector<128x128xf32>
    %51 = arith.select %48, %46, %50 : vector<128x128xi1>, vector<128x128xf32>
    %c1032 = arith.constant 1032 : index
    %c0_22 = arith.constant 0 : index
    %52 = vector.load %arg2[%c1032, %c0_22] : memref<1168x128xf32, #tpu.memory_space<vmem>>, vector<128x8xf32>
    %c1160 = arith.constant 1160 : index
    %c0_23 = arith.constant 0 : index
    %53 = vector.load %arg2[%c1160, %c0_23] : memref<1168x128xf32, #tpu.memory_space<vmem>>, vector<1x8xf32>
    %cst_24 = arith.constant dense<0.000000e+00> : vector<128x8xf32>
    %54 = tpu.matmul %51, %52, %cst_24 {dimension_numbers = #tpu.dot_dimension_numbers<[1], [0], [0], [1], [0, 0, 1, 1], [], []>} : vector<128x128xf32>, vector<128x8xf32>, vector<128x8xf32> -> vector<128x8xf32>
    %55 = vector.broadcast %53 : vector<1x8xf32> to vector<128x8xf32>
    %56 = arith.addf %54, %55 : vector<128x8xf32>
    %cst_25 = arith.constant dense<0xFF800000> : vector<128xf32>
    %57 = vector.multi_reduction <maximumf>, %56, %cst_25 [1] : vector<128x8xf32> to vector<128xf32>
    %58 = vector.shape_cast %57 : vector<128xf32> to vector<128x1xf32>
    %59 = vector.broadcast %58 : vector<128x1xf32> to vector<128x8xf32>
    %60 = arith.subf %56, %59 : vector<128x8xf32>
    %61 = math.exp %60 : vector<128x8xf32>
    %cst_26 = arith.constant dense<0.000000e+00> : vector<128xf32>
    %62 = vector.multi_reduction <add>, %61, %cst_26 [1] : vector<128x8xf32> to vector<128xf32>
    %63 = vector.shape_cast %62 : vector<128xf32> to vector<128x1xf32>
    %64 = vector.broadcast %63 : vector<128x1xf32> to vector<128x8xf32>
    %65 = arith.divf %61, %64 : vector<128x8xf32>
    %c0_27 = arith.constant 0 : index
    %c0_28 = arith.constant 0 : index
    %66 = vector.load %arg3[%c0_27, %c0_28] : memref<8x512xf32, #tpu.memory_space<vmem>>, vector<8x512xf32>
    %cst_29 = arith.constant dense<0.000000e+00> : vector<128x512xf32>
    %67 = tpu.matmul %65, %66, %cst_29 {dimension_numbers = #tpu.dot_dimension_numbers<[1], [0], [0], [1], [0, 0, 1, 1], [], []>} : vector<128x8xf32>, vector<8x512xf32>, vector<128x512xf32> -> vector<128x512xf32>
    %68 = arith.mulf %67, %0 : vector<128x512xf32>
    %c0_30 = arith.constant 0 : index
    %c0_31 = arith.constant 0 : index
    %69 = vector.load %arg4[%c0_30, %c0_31] : memref<512x64xf32, #tpu.memory_space<vmem>>, vector<512x64xf32>
    %cst_32 = arith.constant dense<0.000000e+00> : vector<128x64xf32>
    %70 = tpu.matmul %68, %69, %cst_32 {dimension_numbers = #tpu.dot_dimension_numbers<[1], [0], [0], [1], [0, 0, 1, 1], [], []>} : vector<128x512xf32>, vector<512x64xf32>, vector<128x64xf32> -> vector<128x64xf32>
    %c0_33 = arith.constant 0 : index
    %c0_34 = arith.constant 0 : index
    %71 = vector.load %arg5[%c0_33, %c0_34] : memref<128x64xf32, #tpu.memory_space<vmem>>, vector<128x64xf32>
    tpu.vector_store %arg5[%c0_33, %c0_34], %70 {strides = array<i32>} : memref<128x64xf32, #tpu.memory_space<vmem>>, vector<128x64xf32>,
    return
  }
  func.func @transform_0(%arg0: i32) -> (i32, i32) {
    %c0_i32 = arith.constant 0 : i32
    %c0_i32_0 = arith.constant 0 : i32
    return %arg0, %c0_i32 : i32, i32
  }
  func.func @transform_1(%arg0: i32) -> (i32, i32) {
    %c0_i32 = arith.constant 0 : i32
    %c0_i32_0 = arith.constant 0 : i32
    %c0_i32_1 = arith.constant 0 : i32
    return %c0_i32, %c0_i32_0 : i32, i32
  }
  func.func @transform_2(%arg0: i32) -> (i32, i32) {
    %c0_i32 = arith.constant 0 : i32
    %c0_i32_0 = arith.constant 0 : i32
    %c0_i32_1 = arith.constant 0 : i32
    return %c0_i32, %c0_i32_0 : i32, i32
  }
  func.func @transform_3(%arg0: i32) -> (i32, i32) {
    %c0_i32 = arith.constant 0 : i32
    %c0_i32_0 = arith.constant 0 : i32
    %c0_i32_1 = arith.constant 0 : i32
    return %c0_i32, %c0_i32_0 : i32, i32
  }
  func.func @transform_4(%arg0: i32) -> (i32, i32) {
    %c0_i32 = arith.constant 0 : i32
    %c0_i32_0 = arith.constant 0 : i32
    return %arg0, %c0_i32 : i32, i32
  }
}

</mosaic_0001>

<llo_original>
// kernel: audio_att_forward.1
$region0: #{audio_att_forward.1}
  #allocation0 [shape = 'u32[]', space=smem, size = 0x4, offset = 0x4, fixed_abs, tag = 'smem constant byte address 0x4 - core index']
  #allocation1 [shape = 'u32[72,128]{1,0:T(1,128)}', space=vmem, size = 0x9000, scoped, tag = 'internal scratch']
  %s0 = inlined_call_operand.vmem [shape: f32[256,512], index: 0, kind: input, shape index: {}]
  %s1 = inlined_call_operand.vmem [shape: f32[1168,128], index: 1, kind: input, shape index: {}]
  %s2 = inlined_call_operand.vmem [shape: f32[8,512], index: 2, kind: input, shape index: {}]
  %s3 = inlined_call_operand.vmem [shape: f32[512,64], index: 3, kind: input, shape index: {}]
  %s4 = inlined_call_operand.vmem [shape: f32[256,64], index: 4, kind: output, shape index: {}]
  %s5 = sld [smem:[#allocation0]]
  $region49: #{audio_att_forward.1} parent=0
    _
  %s7 = ssub.s32 1, %s5
  %s8 = scalar_select 0, %s7, %s5
  loop: start=0, step=1, limit=4
  $region2: #{audio_att_forward.1} parent=0 // loop_pre_header
    _
  $region3: #{audio_att_forward.1} parent=0 // loop_header
    %s10 = sphi 0, %s14
    %p11 = scmp.ge.s32.totalorder %s10, 4
    %s20 = sphi 0, %s22
    %s23 = sphi 0, %s20
    %s24 = sphi 0, %s23
    %s40 = sphi 0, %s24
    %s44 = sphi 0, %s44
    %s46 = sphi 0, %s44
    %s47 = sphi 0, %s46
    %s61 = sphi 0, %s47
    %s65 = sphi 0, %s65
    %s67 = sphi 0, %s65
    %s68 = sphi 0, %s67
    %s82 = sphi 0, %s68
    %s86 = sphi 0, %s86
    %s88 = sphi 0, %s86
    %s89 = sphi 0, %s88
    %s103 = sphi 0, %s89
    %s109 = sphi 0, %s111
    %s112 = sphi 0, %s109
    %s113 = sphi 0, %s112
    %s129 = sphi 0, %s113
  $region4: #{audio_att_forward.1} parent=0 // loop_header_branch
    %13 = sbr.rel (%p11) target = $region8
  $region5: #{audio_att_forward.1} parent=0 // loop_body
    %s15 = ssub.s32 %s10, 1
    %s16 = ssub.s32 %s10, 2
    %s17 = sadd.s32 %s10, 1
    %s18 = ssub.s32 %s10, %s17
    %p19 = scmp.eq.s32.totalorder %s18, 0
    %s21 = sadd.s32 %s20, 1
    %s22 = scalar_select %p19, %s20, %s21
    %p25 = pneg %p19
    %p26 = scmp.eq.s32.totalorder %s10, 1
    %p27 = por %p25, %p26
    %p28 = scmp.ne.s32.totalorder %s20, %s23
    %p29 = scmp.eq.s32.totalorder %s10, 0
    %p30 = por %p28, %p29
    %p31 = scmp.ne.s32.totalorder %s20, %s23
    %p32 = scmp.eq.s32.totalorder %s15, 1
    %p33 = por %p31, %p32
    %p34 = scmp.ne.s32.totalorder %s23, %s24
    %p35 = scmp.eq.s32.totalorder %s15, 0
    %p36 = por %p34, %p35
    %p37 = scmp.ne.s32.totalorder %s23, %s24
    %p38 = scmp.eq.s32.totalorder %s16, 1
    %p39 = por %p37, %p38
    %p41 = scmp.ne.s32.totalorder %s24, %s40
    %p42 = scmp.eq.s32.totalorder %s16, 0
    %p43 = por %p41, %p42
    %s45 = sadd.s32 %s44, 1
    %p48 = scmp.eq.s32.totalorder %s10, 1
    %p49 = scmp.ne.s32.totalorder %s44, %s46
    %p50 = scmp.eq.s32.totalorder %s10, 0
    %p51 = por %p49, %p50
    %p52 = scmp.ne.s32.totalorder %s44, %s46
    %p53 = scmp.eq.s32.totalorder %s15, 1
    %p54 = por %p52, %p53
    %p55 = scmp.ne.s32.totalorder %s46, %s47
    %p56 = scmp.eq.s32.totalorder %s15, 0
    %p57 = por %p55, %p56
    %p58 = scmp.ne.s32.totalorder %s46, %s47
    %p59 = scmp.eq.s32.totalorder %s16, 1
    %p60 = por %p58, %p59
    %p62 = scmp.ne.s32.totalorder %s47, %s61
    %p63 = scmp.eq.s32.totalorder %s16, 0
    %p64 = por %p62, %p63
    %s66 = sadd.s32 %s65, 1
    %p69 = scmp.eq.s32.totalorder %s10, 1
    %p70 = scmp.ne.s32.totalorder %s65, %s67
    %p71 = scmp.eq.s32.totalorder %s10, 0
    %p72 = por %p70, %p71
    %p73 = scmp.ne.s32.totalorder %s65, %s67
    %p74 = scmp.eq.s32.totalorder %s15, 1
    %p75 = por %p73, %p74
    %p76 = scmp.ne.s32.totalorder %s67, %s68
    %p77 = scmp.eq.s32.totalorder %s15, 0
    %p78 = por %p76, %p77
    %p79 = scmp.ne.s32.totalorder %s67, %s68
    %p80 = scmp.eq.s32.totalorder %s16, 1
    %p81 = por %p79, %p80
    %p83 = scmp.ne.s32.totalorder %s68, %s82
    %p84 = scmp.eq.s32.totalorder %s16, 0
    %p85 = por %p83, %p84
    %s87 = sadd.s32 %s86, 1
    %p90 = scmp.eq.s32.totalorder %s10, 1
    %p91 = scmp.ne.s32.totalorder %s86, %s88
    %p92 = scmp.eq.s32.totalorder %s10, 0
    %p93 = por %p91, %p92
    %p94 = scmp.ne.s32.totalorder %s86, %s88
    %p95 = scmp.eq.s32.totalorder %s15, 1
    %p96 = por %p94, %p95
    %p97 = scmp.ne.s32.totalorder %s88, %s89
    %p98 = scmp.eq.s32.totalorder %s15, 0
    %p99 = por %p97, %p98
    %p100 = scmp.ne.s32.totalorder %s88, %s89
    %p101 = scmp.eq.s32.totalorder %s16, 1
    %p102 = por %p100, %p101
    %p104 = scmp.ne.s32.totalorder %s89, %s103
    %p105 = scmp.eq.s32.totalorder %s16, 0
    %p106 = por %p104, %p105
    %s107 = ssub.s32 %s10, %s17
    %p108 = scmp.eq.s32.totalorder %s107, 0
    %s110 = sadd.s32 %s109, 1
    %s111 = scalar_select %p108, %s109, %s110
    %p114 = pneg %p108
    %p115 = scmp.eq.s32.totalorder %s10, 1
    %p116 = por %p114, %p115
    %p117 = scmp.ne.s32.totalorder %s109, %s112
    %p118 = scmp.eq.s32.totalorder %s10, 0
    %p119 = por %p117, %p118
    %p120 = scmp.ne.s32.totalorder %s109, %s112
    %p121 = scmp.eq.s32.totalorder %s15, 1
    %p122 = por %p120, %p121
    %p123 = scmp.ne.s32.totalorder %s112, %s113
    %p124 = scmp.eq.s32.totalorder %s15, 0
    %p125 = por %p123, %p124
    %p126 = scmp.ne.s32.totalorder %s112, %s113
    %p127 = scmp.eq.s32.totalorder %s16, 1
    %p128 = por %p126, %p127
    %p130 = scmp.ne.s32.totalorder %s113, %s129
    %p131 = scmp.eq.s32.totalorder %s16, 0
    %p132 = por %p130, %p131
    %p133 = scmp.le.s32.totalorder 1, %s10
    %p134 = scmp.lt.s32.totalorder %s10, 3
    %p135 = pnand %p133, %p134
    %p136 = pneg %p135
    // Predicated region
    $region9: #{audio_att_forward.1} parent=5 // pred_check
      _
    $region10: #{audio_att_forward.1} parent=5 // pred_check_branch
      %138 = sbr.rel (%p135) target = $region12
    $region11: #{audio_att_forward.1} parent=5 // pred_region
      %s139 = ssub.s32 %s10, 1
      // Predicated region
      $region13: #{audio_att_forward.1} parent=11 // pred_check
        %p140 = pneg %p57
      $region14: #{audio_att_forward.1} parent=11 // pred_check_branch
        %142 = sbr.rel (%p140) target = $region16
      $region15: #{audio_att_forward.1} parent=11 // pred_region
        _
      $region16: #{audio_att_forward.1} parent=11 // pred_fallthru
        _
      // Predicated region
      $region17: #{audio_att_forward.1} parent=11 // pred_check
        %p143 = pneg %p78
      $region18: #{audio_att_forward.1} parent=11 // pred_check_branch
        %145 = sbr.rel (%p143) target = $region20
      $region19: #{audio_att_forward.1} parent=11 // pred_region
        _
      $region20: #{audio_att_forward.1} parent=11 // pred_fallthru
        _
      // Predicated region
      $region21: #{audio_att_forward.1} parent=11 // pred_check
        %p146 = pneg %p99
      $region22: #{audio_att_forward.1} parent=11 // pred_check_branch
        %148 = sbr.rel (%p146) target = $region24
      $region23: #{audio_att_forward.1} parent=11 // pred_region
        _
      $region24: #{audio_att_forward.1} parent=11 // pred_fallthru
        _
    $region12: #{audio_att_forward.1} parent=5 // pred_fallthru
      _
    %p149 = scmp.lt.s32.totalorder %s10, 2
    // Predicated region
    $region25: #{audio_att_forward.1} parent=5 // pred_check
      %p150 = pneg %p149
    $region26: #{audio_att_forward.1} parent=5 // pred_check_branch
      %152 = sbr.rel (%p150) target = $region28
    $region27: #{audio_att_forward.1} parent=5 // pred_region
      // Predicated region
      $region29: #{audio_att_forward.1} parent=27 // pred_check
        %p153 = pneg %p30
      $region30: #{audio_att_forward.1} parent=27 // pred_check_branch
        %155 = sbr.rel (%p153) target = $region32
      $region31: #{audio_att_forward.1} parent=27 // pred_region
        %s156 = smul.u32 16, %s10
        %p157 = scmp.lt.s32.totalorder %s156, 31
        %s158 = scalar_select %p157, %s156, 31
        %s159 = smul.addr %s158, 4
        %s160 = smul.addr %s159, 8
        %s161 = scalar_lea.vmem %s0, %s160
        %s162 = smul.u32 16, %s10
      $region32: #{audio_att_forward.1} parent=27 // pred_fallthru
        _
    $region28: #{audio_att_forward.1} parent=5 // pred_fallthru
      _
    %p163 = scmp.le.s32.totalorder 1, %s10
    %p164 = scmp.lt.s32.totalorder %s10, 3
    %p165 = pnand %p163, %p164
    %p166 = pneg %p165
    // Predicated region
    $region33: #{audio_att_forward.1} parent=5 // pred_check
      _
    $region34: #{audio_att_forward.1} parent=5 // pred_check_branch
      %168 = sbr.rel (%p165) target = $region36
    $region35: #{audio_att_forward.1} parent=5 // pred_region
      %s169 = ssub.s32 %s10, 1
      %s170 = smul.u32 16, %s15
      %p171 = scmp.lt.s32.totalorder %s170, 31
      %s172 = scalar_select %p171, %s170, 31
      %s173 = smul.addr %s172, 4
      %s174 = smul.addr %s173, 8
      %s175 = scalar_lea.vmem %s0, %s174
      %p176 = pneg %p36
      %p177 = pneg %p33
      %p178 = pneg %p57
      %p179 = pneg %p54
      %p180 = pneg %p78
      %p181 = pneg %p75
      %p182 = pneg %p99
      %p183 = pneg %p96
      %p184 = pneg %p125
      %p185 = pneg %p122
      %s186 = smul.u32 16, %s15
      %p187 = scmp.lt.s32.totalorder %s186, 31
      %s188 = scalar_select %p187, %s186, 31
      %s189 = smul.addr %s188, 8
      %s190 = scalar_lea.vmem %s4, %s189
      %s191 = smul.u32 16, %s15
      %p192 = scmp.lt.s32.totalorder %s191, 31
      %s193 = scalar_select %p192, %s191, 31
      %s194 = smul.addr %s193, 4
      %s195 = smul.addr %s194, 8
      %s196 = scalar_lea.vmem %s0, %s195
      %s197 = smul.u32 16, %s15
      %s198 = smul.u32 16, %s15
      %p199 = scmp.lt.s32.totalorder %s198, 31
      %s200 = scalar_select %p199, %s198, 31
      %s201 = smul.addr %s200, 8
      %s202 = scalar_lea.vmem %s4, %s201
      %s203 = smul.u32 16, %s15
      %v204 = vld [vmem:[%s196] sm:$0xff]
      %v205 = vld [vmem:[%s196 + $0x8] sm:$0xff]
      %v206 = vld [vmem:[%s196 + $0x10] sm:$0xff]
      %v207 = vld [vmem:[%s196 + $0x18] sm:$0xff]
      %v208 = vld [vmem:[%s196 + $0x20] sm:$0xff]
      %v209 = vld [vmem:[%s196 + $0x28] sm:$0xff]
      %v210 = vld [vmem:[%s196 + $0x30] sm:$0xff]
      %v211 = vld [vmem:[%s196 + $0x38] sm:$0xff]
      %v212 = vld [vmem:[%s196 + $0x40] sm:$0xff]
      %v213 = vld [vmem:[%s196 + $0x48] sm:$0xff]
      %v214 = vld [vmem:[%s196 + $0x50] sm:$0xff]
      %v215 = vld [vmem:[%s196 + $0x58] sm:$0xff]
      %v216 = vld [vmem:[%s196 + $0x60] sm:$0xff]
      %v217 = vld [vmem:[%s196 + $0x68] sm:$0xff]
      %v218 = vld [vmem:[%s196 + $0x70] sm:$0xff]
      %v219 = vld [vmem:[%s196 + $0x78] sm:$0xff]
      %v220 = vld [vmem:[%s196 + $0x80] sm:$0xff]
      %v221 = vld [vmem:[%s196 + $0x88] sm:$0xff]
      %v222 = vld [vmem:[%s196 + $0x90] sm:$0xff]
      %v223 = vld [vmem:[%s196 + $0x98] sm:$0xff]
      %v224 = vld [vmem:[%s196 + $0xa0] sm:$0xff]
      %v225 = vld [vmem:[%s196 + $0xa8] sm:$0xff]
      %v226 = vld [vmem:[%s196 + $0xb0] sm:$0xff]
      %v227 = vld [vmem:[%s196 + $0xb8] sm:$0xff]
      %v228 = vld [vmem:[%s196 + $0xc0] sm:$0xff]
      %v229 = vld [vmem:[%s196 + $0xc8] sm:$0xff]
      %v230 = vld [vmem:[%s196 + $0xd0] sm:$0xff]
      %v231 = vld [vmem:[%s196 + $0xd8] sm:$0xff]
      %v232 = vld [vmem:[%s196 + $0xe0] sm:$0xff]
      %v233 = vld [vmem:[%s196 + $0xe8] sm:$0xff]
      %v234 = vld [vmem:[%s196 + $0xf0] sm:$0xff]
      %v235 = vld [vmem:[%s196 + $0xf8] sm:$0xff]
      %v236 = vld [vmem:[%s196 + $0x100] sm:$0xff]
      %v237 = vld [vmem:[%s196 + $0x108] sm:$0xff]
      %v238 = vld [vmem:[%s196 + $0x110] sm:$0xff]
      %v239 = vld [vmem:[%s196 + $0x118] sm:$0xff]
      %v240 = vld [vmem:[%s196 + $0x120] sm:$0xff]
      %v241 = vld [vmem:[%s196 + $0x128] sm:$0xff]
      %v242 = vld [vmem:[%s196 + $0x130] sm:$0xff]
      %v243 = vld [vmem:[%s196 + $0x138] sm:$0xff]
      %v244 = vld [vmem:[%s196 + $0x140] sm:$0xff]
      %v245 = vld [vmem:[%s196 + $0x148] sm:$0xff]
      %v246 = vld [vmem:[%s196 + $0x150] sm:$0xff]
      %v247 = vld [vmem:[%s196 + $0x158] sm:$0xff]
      %v248 = vld [vmem:[%s196 + $0x160] sm:$0xff]
      %v249 = vld [vmem:[%s196 + $0x168] sm:$0xff]
      %v250 = vld [vmem:[%s196 + $0x170] sm:$0xff]
      %v251 = vld [vmem:[%s196 + $0x178] sm:$0xff]
      %v252 = vld [vmem:[%s196 + $0x180] sm:$0xff]
      %v253 = vld [vmem:[%s196 + $0x188] sm:$0xff]
      %v254 = vld [vmem:[%s196 + $0x190] sm:$0xff]
      %v255 = vld [vmem:[%s196 + $0x198] sm:$0xff]
      %v256 = vld [vmem:[%s196 + $0x1a0] sm:$0xff]
      %v257 = vld [vmem:[%s196 + $0x1a8] sm:$0xff]
      %v258 = vld [vmem:[%s196 + $0x1b0] sm:$0xff]
      %v259 = vld [vmem:[%s196 + $0x1b8] sm:$0xff]
      %v260 = vld [vmem:[%s196 + $0x1c0] sm:$0xff]
      %v261 = vld [vmem:[%s196 + $0x1c8] sm:$0xff]
      %v262 = vld [vmem:[%s196 + $0x1d0] sm:$0xff]
      %v263 = vld [vmem:[%s196 + $0x1d8] sm:$0xff]
      %v264 = vld [vmem:[%s196 + $0x1e0] sm:$0xff]
      %v265 = vld [vmem:[%s196 + $0x1e8] sm:$0xff]
      %v266 = vld [vmem:[%s196 + $0x1f0] sm:$0xff]
      %v267 = vld [vmem:[%s196 + $0x1f8] sm:$0xff]
      %v268 = vld [vmem:[%s1 + $0x400] sm:$0xff]
      %v269 = vld [vmem:[%s1] sm:$0xff]
      %v270 = vld [vmem:[%s1 + $0x8] sm:$0xff]
      %v271 = vld [vmem:[%s1 + $0x10] sm:$0xff]
      %v272 = vld [vmem:[%s1 + $0x18] sm:$0xff]
      %v273 = vld [vmem:[%s1 + $0x20] sm:$0xff]
      %v274 = vld [vmem:[%s1 + $0x28] sm:$0xff]
      %v275 = vld [vmem:[%s1 + $0x30] sm:$0xff]
      %v276 = vld [vmem:[%s1 + $0x38] sm:$0xff]
      %v277 = vld [vmem:[%s1 + $0x40] sm:$0xff]
      %v278 = vld [vmem:[%s1 + $0x48] sm:$0xff]
      %v279 = vld [vmem:[%s1 + $0x50] sm:$0xff]
      %v280 = vld [vmem:[%s1 + $0x58] sm:$0xff]
      %v281 = vld [vmem:[%s1 + $0x60] sm:$0xff]
      %v282 = vld [vmem:[%s1 + $0x68] sm:$0xff]
      %v283 = vld [vmem:[%s1 + $0x70] sm:$0xff]
      %v284 = vld [vmem:[%s1 + $0x78] sm:$0xff]
      %v285 = vld [vmem:[%s1 + $0x80] sm:$0xff]
      %v286 = vld [vmem:[%s1 + $0x88] sm:$0xff]
      %v287 = vld [vmem:[%s1 + $0x90] sm:$0xff]
      %v288 = vld [vmem:[%s1 + $0x98] sm:$0xff]
      %v289 = vld [vmem:[%s1 + $0xa0] sm:$0xff]
      %v290 = vld [vmem:[%s1 + $0xa8] sm:$0xff]
      %v291 = vld [vmem:[%s1 + $0xb0] sm:$0xff]
      %v292 = vld [vmem:[%s1 + $0xb8] sm:$0xff]
      %v293 = vld [vmem:[%s1 + $0xc0] sm:$0xff]
      %v294 = vld [vmem:[%s1 + $0xc8] sm:$0xff]
      %v295 = vld [vmem:[%s1 + $0xd0] sm:$0xff]
      %v296 = vld [vmem:[%s1 + $0xd8] sm:$0xff]
      %v297 = vld [vmem:[%s1 + $0xe0] sm:$0xff]
      %v298 = vld [vmem:[%s1 + $0xe8] sm:$0xff]
      %v299 = vld [vmem:[%s1 + $0xf0] sm:$0xff]
      %v300 = vld [vmem:[%s1 + $0xf8] sm:$0xff]
      %v301 = vld [vmem:[%s1 + $0x100] sm:$0xff]
      %v302 = vld [vmem:[%s1 + $0x108] sm:$0xff]
      %v303 = vld [vmem:[%s1 + $0x110] sm:$0xff]
      %v304 = vld [vmem:[%s1 + $0x118] sm:$0xff]
      %v305 = vld [vmem:[%s1 + $0x120] sm:$0xff]
      %v306 = vld [vmem:[%s1 + $0x128] sm:$0xff]
      %v307 = vld [vmem:[%s1 + $0x130] sm:$0xff]
      %v308 = vld [vmem:[%s1 + $0x138] sm:$0xff]
      %v309 = vld [vmem:[%s1 + $0x140] sm:$0xff]
      %v310 = vld [vmem:[%s1 + $0x148] sm:$0xff]
      %v311 = vld [vmem:[%s1 + $0x150] sm:$0xff]
      %v312 = vld [vmem:[%s1 + $0x158] sm:$0xff]
      %v313 = vld [vmem:[%s1 + $0x160] sm:$0xff]
      %v314 = vld [vmem:[%s1 + $0x168] sm:$0xff]
      %v315 = vld [vmem:[%s1 + $0x170] sm:$0xff]
      %v316 = vld [vmem:[%s1 + $0x178] sm:$0xff]
      %v317 = vld [vmem:[%s1 + $0x180] sm:$0xff]
      %v318 = vld [vmem:[%s1 + $0x188] sm:$0xff]
      %v319 = vld [vmem:[%s1 + $0x190] sm:$0xff]
      %v320 = vld [vmem:[%s1 + $0x198] sm:$0xff]
      %v321 = vld [vmem:[%s1 + $0x1a0] sm:$0xff]
      %v322 = vld [vmem:[%s1 + $0x1a8] sm:$0xff]
      %v323 = vld [vmem:[%s1 + $0x1b0] sm:$0xff]
      %v324 = vld [vmem:[%s1 + $0x1b8] sm:$0xff]
      %v325 = vld [vmem:[%s1 + $0x1c0] sm:$0xff]
      %v326 = vld [vmem:[%s1 + $0x1c8] sm:$0xff]
      %v327 = vld [vmem:[%s1 + $0x1d0] sm:$0xff]
      %v328 = vld [vmem:[%s1 + $0x1d8] sm:$0xff]
      %v329 = vld [vmem:[%s1 + $0x1e0] sm:$0xff]
      %v330 = vld [vmem:[%s1 + $0x1e8] sm:$0xff]
      %v331 = vld [vmem:[%s1 + $0x1f0] sm:$0xff]
      %v332 = vld [vmem:[%s1 + $0x1f8] sm:$0xff]
      %v333 = vperm.slane %v268, 0
      %334 = vmatpush.msra.mxu0 %v284
      %335 = vmatpush.msra.mxu0 %v283
      %336 = vmatpush.msra.mxu0 %v282
      %337 = vmatpush.msra.mxu0 %v281
      %338 = vmatpush.msra.mxu0 %v280
      %339 = vmatpush.msra.mxu0 %v279
      %340 = vmatpush.msra.mxu0 %v278
      %341 = vmatpush.msra.mxu0 %v277
      %342 = vmatpush.msra.mxu0 %v276
      %343 = vmatpush.msra.mxu0 %v275
      %344 = vmatpush.msra.mxu0 %v274
      %345 = vmatpush.msra.mxu0 %v273
      %346 = vmatpush.msra.mxu0 %v272
      %347 = vmatpush.msra.mxu0 %v271
      %348 = vmatpush.msra.mxu0 %v270
      %349 = vmatpush.msra.mxu0 %v269
      %350 = vmatmul.f32.gmra.mxu0 %v204
      %v351 = vpop.f32.mrf.mxu0
      %v352 = vadd.f32 %v333, %v351
      %353 = vmatmul.f32.gmra.mxu0 %v208
      %v354 = vpop.f32.mrf.mxu0
      %v355 = vadd.f32 %v333, %v354
      %356 = vmatmul.f32.gmra.mxu0 %v212
      %v357 = vpop.f32.mrf.mxu0
      %v358 = vadd.f32 %v333, %v357
      %359 = vmatmul.f32.gmra.mxu0 %v216
      %v360 = vpop.f32.mrf.mxu0
      %v361 = vadd.f32 %v333, %v360
      %362 = vmatmul.f32.gmra.mxu0 %v220
      %v363 = vpop.f32.mrf.mxu0
      %v364 = vadd.f32 %v333, %v363
      %365 = vmatmul.f32.gmra.mxu0 %v224
      %v366 = vpop.f32.mrf.mxu0
      %v367 = vadd.f32 %v333, %v366
      %368 = vmatmul.f32.gmra.mxu0 %v228
      %v369 = vpop.f32.mrf.mxu0
      %v370 = vadd.f32 %v333, %v369
      %371 = vmatmul.f32.gmra.mxu0 %v232
      %v372 = vpop.f32.mrf.mxu0
      %v373 = vadd.f32 %v333, %v372
      %374 = vmatmul.f32.gmra.mxu0 %v236
      %v375 = vpop.f32.mrf.mxu0
      %v376 = vadd.f32 %v333, %v375
      %377 = vmatmul.f32.gmra.mxu0 %v240
      %v378 = vpop.f32.mrf.mxu0
      %v379 = vadd.f32 %v333, %v378
      %380 = vmatmul.f32.gmra.mxu0 %v244
      %v381 = vpop.f32.mrf.mxu0
      %v382 = vadd.f32 %v333, %v381
      %383 = vmatmul.f32.gmra.mxu0 %v248
      %v384 = vpop.f32.mrf.mxu0
      %v385 = vadd.f32 %v333, %v384
      %386 = vmatmul.f32.gmra.mxu0 %v252
      %v387 = vpop.f32.mrf.mxu0
      %v388 = vadd.f32 %v333, %v387
      %389 = vmatmul.f32.gmra.mxu0 %v256
      %v390 = vpop.f32.mrf.mxu0
      %v391 = vadd.f32 %v333, %v390
      %392 = vmatmul.f32.gmra.mxu0 %v260
      %v393 = vpop.f32.mrf.mxu0
      %v394 = vadd.f32 %v333, %v393
      %395 = vmatmul.f32.gmra.mxu0 %v264
      %v396 = vpop.f32.mrf.mxu0
      %v397 = vadd.f32 %v333, %v396
      %398 = vdwg.mxu0
      %399 = vmatpush.msra.mxu0 %v300
      %400 = vmatpush.msra.mxu0 %v299
      %401 = vmatpush.msra.mxu0 %v298
      %402 = vmatpush.msra.mxu0 %v297
      %403 = vmatpush.msra.mxu0 %v296
      %404 = vmatpush.msra.mxu0 %v295
      %405 = vmatpush.msra.mxu0 %v294
      %406 = vmatpush.msra.mxu0 %v293
      %407 = vmatpush.msra.mxu0 %v292
      %408 = vmatpush.msra.mxu0 %v291
      %409 = vmatpush.msra.mxu0 %v290
      %410 = vmatpush.msra.mxu0 %v289
      %411 = vmatpush.msra.mxu0 %v288
      %412 = vmatpush.msra.mxu0 %v287
      %413 = vmatpush.msra.mxu0 %v286
      %414 = vmatpush.msra.mxu0 %v285
      %415 = vmatmul.f32.gmra.mxu0 %v205
      %v416 = vpop.f32.mrf.mxu0
      %v417 = vadd.f32 %v352, %v416
      %418 = vmatmul.f32.gmra.mxu0 %v209
      %v419 = vpop.f32.mrf.mxu0
      %v420 = vadd.f32 %v355, %v419
      %421 = vmatmul.f32.gmra.mxu0 %v213
      %v422 = vpop.f32.mrf.mxu0
      %v423 = vadd.f32 %v358, %v422
      %424 = vmatmul.f32.gmra.mxu0 %v217
      %v425 = vpop.f32.mrf.mxu0
      %v426 = vadd.f32 %v361, %v425
      %427 = vmatmul.f32.gmra.mxu0 %v221
      %v428 = vpop.f32.mrf.mxu0
      %v429 = vadd.f32 %v364, %v428
      %430 = vmatmul.f32.gmra.mxu0 %v225
      %v431 = vpop.f32.mrf.mxu0
      %v432 = vadd.f32 %v367, %v431
      %433 = vmatmul.f32.gmra.mxu0 %v229
      %v434 = vpop.f32.mrf.mxu0
      %v435 = vadd.f32 %v370, %v434
      %436 = vmatmul.f32.gmra.mxu0 %v233
      %v437 = vpop.f32.mrf.mxu0
      %v438 = vadd.f32 %v373, %v437
      %439 = vmatmul.f32.gmra.mxu0 %v237
      %v440 = vpop.f32.mrf.mxu0
      %v441 = vadd.f32 %v376, %v440
      %442 = vmatmul.f32.gmra.mxu0 %v241
      %v443 = vpop.f32.mrf.mxu0
      %v444 = vadd.f32 %v379, %v443
      %445 = vmatmul.f32.gmra.mxu0 %v245
      %v446 = vpop.f32.mrf.mxu0
      %v447 = vadd.f32 %v382, %v446
      %448 = vmatmul.f32.gmra.mxu0 %v249
      %v449 = vpop.f32.mrf.mxu0
      %v450 = vadd.f32 %v385, %v449
      %451 = vmatmul.f32.gmra.mxu0 %v253
      %v452 = vpop.f32.mrf.mxu0
      %v453 = vadd.f32 %v388, %v452
      %454 = vmatmul.f32.gmra.mxu0 %v257
      %v455 = vpop.f32.mrf.mxu0
      %v456 = vadd.f32 %v391, %v455
      %457 = vmatmul.f32.gmra.mxu0 %v261
      %v458 = vpop.f32.mrf.mxu0
      %v459 = vadd.f32 %v394, %v458
      %460 = vmatmul.f32.gmra.mxu0 %v265
      %v461 = vpop.f32.mrf.mxu0
      %v462 = vadd.f32 %v397, %v461
      %463 = vdwg.mxu0
      %464 = vmatpush.msra.mxu0 %v316
      %465 = vmatpush.msra.mxu0 %v315
      %466 = vmatpush.msra.mxu0 %v314
      %467 = vmatpush.msra.mxu0 %v313
      %468 = vmatpush.msra.mxu0 %v312
      %469 = vmatpush.msra.mxu0 %v311
      %470 = vmatpush.msra.mxu0 %v310
      %471 = vmatpush.msra.mxu0 %v309
      %472 = vmatpush.msra.mxu0 %v308
      %473 = vmatpush.msra.mxu0 %v307
      %474 = vmatpush.msra.mxu0 %v306
      %475 = vmatpush.msra.mxu0 %v305
      %476 = vmatpush.msra.mxu0 %v304
      %477 = vmatpush.msra.mxu0 %v303
      %478 = vmatpush.msra.mxu0 %v302
      %479 = vmatpush.msra.mxu0 %v301
      %480 = vmatmul.f32.gmra.mxu0 %v206
      %v481 = vpop.f32.mrf.mxu0
      %v482 = vadd.f32 %v417, %v481
      %483 = vmatmul.f32.gmra.mxu0 %v210
      %v484 = vpop.f32.mrf.mxu0
      %v485 = vadd.f32 %v420, %v484
      %486 = vmatmul.f32.gmra.mxu0 %v214
      %v487 = vpop.f32.mrf.mxu0
      %v488 = vadd.f32 %v423, %v487
      %489 = vmatmul.f32.gmra.mxu0 %v218
      %v490 = vpop.f32.mrf.mxu0
      %v491 = vadd.f32 %v426, %v490
      %492 = vmatmul.f32.gmra.mxu0 %v222
      %v493 = vpop.f32.mrf.mxu0
      %v494 = vadd.f32 %v429, %v493
      %495 = vmatmul.f32.gmra.mxu0 %v226
      %v496 = vpop.f32.mrf.mxu0
      %v497 = vadd.f32 %v432, %v496
      %498 = vmatmul.f32.gmra.mxu0 %v230
      %v499 = vpop.f32.mrf.mxu0
      %v500 = vadd.f32 %v435, %v499
      %501 = vmatmul.f32.gmra.mxu0 %v234
      %v502 = vpop.f32.mrf.mxu0
      %v503 = vadd.f32 %v438, %v502
      %504 = vmatmul.f32.gmra.mxu0 %v238
      %v505 = vpop.f32.mrf.mxu0
      %v506 = vadd.f32 %v441, %v505
      %507 = vmatmul.f32.gmra.mxu0 %v242
      %v508 = vpop.f32.mrf.mxu0
      %v509 = vadd.f32 %v444, %v508
      %510 = vmatmul.f32.gmra.mxu0 %v246
      %v511 = vpop.f32.mrf.mxu0
      %v512 = vadd.f32 %v447, %v511
      %513 = vmatmul.f32.gmra.mxu0 %v250
      %v514 = vpop.f32.mrf.mxu0
      %v515 = vadd.f32 %v450, %v514
      %516 = vmatmul.f32.gmra.mxu0 %v254
      %v517 = vpop.f32.mrf.mxu0
      %v518 = vadd.f32 %v453, %v517
      %519 = vmatmul.f32.gmra.mxu0 %v258
      %v520 = vpop.f32.mrf.mxu0
      %v521 = vadd.f32 %v456, %v520
      %522 = vmatmul.f32.gmra.mxu0 %v262
      %v523 = vpop.f32.mrf.mxu0
      %v524 = vadd.f32 %v459, %v523
      %525 = vmatmul.f32.gmra.mxu0 %v266
      %v526 = vpop.f32.mrf.mxu0
      %v527 = vadd.f32 %v462, %v526
      %528 = vdwg.mxu0
      %529 = vmatpush.msra.mxu0 %v332
      %530 = vmatpush.msra.mxu0 %v331
      %531 = vmatpush.msra.mxu0 %v330
      %532 = vmatpush.msra.mxu0 %v329
      %533 = vmatpush.msra.mxu0 %v328
      %534 = vmatpush.msra.mxu0 %v327
      %535 = vmatpush.msra.mxu0 %v326
      %536 = vmatpush.msra.mxu0 %v325
      %537 = vmatpush.msra.mxu0 %v324
      %538 = vmatpush.msra.mxu0 %v323
      %539 = vmatpush.msra.mxu0 %v322
      %540 = vmatpush.msra.mxu0 %v321
      %541 = vmatpush.msra.mxu0 %v320
      %542 = vmatpush.msra.mxu0 %v319
      %543 = vmatpush.msra.mxu0 %v318
      %544 = vmatpush.msra.mxu0 %v317
      %545 = vmatmul.f32.gmra.mxu0 %v207
      %v546 = vpop.f32.mrf.mxu0
      %v547 = vadd.f32 %v482, %v546
      %548 = vmatmul.f32.gmra.mxu0 %v211
      %v549 = vpop.f32.mrf.mxu0
      %v550 = vadd.f32 %v485, %v549
      %551 = vmatmul.f32.gmra.mxu0 %v215
      %v552 = vpop.f32.mrf.mxu0
      %v553 = vadd.f32 %v488, %v552
      %554 = vmatmul.f32.gmra.mxu0 %v219
      %v555 = vpop.f32.mrf.mxu0
      %v556 = vadd.f32 %v491, %v555
      %557 = vmatmul.f32.gmra.mxu0 %v223
      %v558 = vpop.f32.mrf.mxu0
      %v559 = vadd.f32 %v494, %v558
      %560 = vmatmul.f32.gmra.mxu0 %v227
      %v561 = vpop.f32.mrf.mxu0
      %v562 = vadd.f32 %v497, %v561
      %563 = vmatmul.f32.gmra.mxu0 %v231
      %v564 = vpop.f32.mrf.mxu0
      %v565 = vadd.f32 %v500, %v564
      %566 = vmatmul.f32.gmra.mxu0 %v235
      %v567 = vpop.f32.mrf.mxu0
      %v568 = vadd.f32 %v503, %v567
      %569 = vmatmul.f32.gmra.mxu0 %v239
      %v570 = vpop.f32.mrf.mxu0
      %v571 = vadd.f32 %v506, %v570
      %572 = vmatmul.f32.gmra.mxu0 %v243
      %v573 = vpop.f32.mrf.mxu0
      %v574 = vadd.f32 %v509, %v573
      %575 = vmatmul.f32.gmra.mxu0 %v247
      %v576 = vpop.f32.mrf.mxu0
      %v577 = vadd.f32 %v512, %v576
      %578 = vmatmul.f32.gmra.mxu0 %v251
      %v579 = vpop.f32.mrf.mxu0
      %v580 = vadd.f32 %v515, %v579
      %581 = vmatmul.f32.gmra.mxu0 %v255
      %v582 = vpop.f32.mrf.mxu0
      %v583 = vadd.f32 %v518, %v582
      %584 = vmatmul.f32.gmra.mxu0 %v259
      %v585 = vpop.f32.mrf.mxu0
      %v586 = vadd.f32 %v521, %v585
      %587 = vmatmul.f32.gmra.mxu0 %v263
      %v588 = vpop.f32.mrf.mxu0
      %v589 = vadd.f32 %v524, %v588
      %590 = vmatmul.f32.gmra.mxu0 %v267
      %v591 = vpop.f32.mrf.mxu0
      %v592 = vadd.f32 %v527, %v591
      %593 = vdwg.mxu0
      %vm594 = vcmp.ge.f32.partialorder %v547, 0.0
      %vm595 = vcmp.ge.f32.partialorder %v550, 0.0
      %vm596 = vcmp.ge.f32.partialorder %v553, 0.0
      %vm597 = vcmp.ge.f32.partialorder %v556, 0.0
      %vm598 = vcmp.ge.f32.partialorder %v559, 0.0
      %vm599 = vcmp.ge.f32.partialorder %v562, 0.0
      %vm600 = vcmp.ge.f32.partialorder %v565, 0.0
      %vm601 = vcmp.ge.f32.partialorder %v568, 0.0
      %vm602 = vcmp.ge.f32.partialorder %v571, 0.0
      %vm603 = vcmp.ge.f32.partialorder %v574, 0.0
      %vm604 = vcmp.ge.f32.partialorder %v577, 0.0
      %vm605 = vcmp.ge.f32.partialorder %v580, 0.0
      %vm606 = vcmp.ge.f32.partialorder %v583, 0.0
      %vm607 = vcmp.ge.f32.partialorder %v586, 0.0
      %vm608 = vcmp.ge.f32.partialorder %v589, 0.0
      %vm609 = vcmp.ge.f32.partialorder %v592, 0.0
      %v610 = vmul.f32 %v547, 0.02
      %v611 = vmul.f32 %v550, 0.02
      %v612 = vmul.f32 %v553, 0.02
      %v613 = vmul.f32 %v556, 0.02
      %v614 = vmul.f32 %v559, 0.02
      %v615 = vmul.f32 %v562, 0.02
      %v616 = vmul.f32 %v565, 0.02
      %v617 = vmul.f32 %v568, 0.02
      %v618 = vmul.f32 %v571, 0.02
      %v619 = vmul.f32 %v574, 0.02
      %v620 = vmul.f32 %v577, 0.02
      %v621 = vmul.f32 %v580, 0.02
      %v622 = vmul.f32 %v583, 0.02
      %v623 = vmul.f32 %v586, 0.02
      %v624 = vmul.f32 %v589, 0.02
      %v625 = vmul.f32 %v592, 0.02
      %v626 = vsel %vm594, %v547, %v610
      %v627 = vsel %vm595, %v550, %v611
      %v628 = vsel %vm596, %v553, %v612
      %v629 = vsel %vm597, %v556, %v613
      %v630 = vsel %vm598, %v559, %v614
      %v631 = vsel %vm599, %v562, %v615
      %v632 = vsel %vm600, %v565, %v616
      %v633 = vsel %vm601, %v568, %v617
      %v634 = vsel %vm602, %v571, %v618
      %v635 = vsel %vm603, %v574, %v619
      %v636 = vsel %vm604, %v577, %v620
      %v637 = vsel %vm605, %v580, %v621
      %v638 = vsel %vm606, %v583, %v622
      %v639 = vsel %vm607, %v586, %v623
      %v640 = vsel %vm608, %v589, %v624
      %v641 = vsel %vm609, %v592, %v625
      %v642 = vld [vmem:[%s1 + $0x200] sm:$0xff]
      %v643 = vld [vmem:[%s1 + $0x208] sm:$0xff]
      %v644 = vld [vmem:[%s1 + $0x210] sm:$0xff]
      %v645 = vld [vmem:[%s1 + $0x218] sm:$0xff]
      %v646 = vld [vmem:[%s1 + $0x220] sm:$0xff]
      %v647 = vld [vmem:[%s1 + $0x228] sm:$0xff]
      %v648 = vld [vmem:[%s1 + $0x230] sm:$0xff]
      %v649 = vld [vmem:[%s1 + $0x238] sm:$0xff]
      %v650 = vld [vmem:[%s1 + $0x240] sm:$0xff]
      %v651 = vld [vmem:[%s1 + $0x248] sm:$0xff]
      %v652 = vld [vmem:[%s1 + $0x250] sm:$0xff]
      %v653 = vld [vmem:[%s1 + $0x258] sm:$0xff]
      %v654 = vld [vmem:[%s1 + $0x260] sm:$0xff]
      %v655 = vld [vmem:[%s1 + $0x268] sm:$0xff]
      %v656 = vld [vmem:[%s1 + $0x270] sm:$0xff]
      %v657 = vld [vmem:[%s1 + $0x278] sm:$0xff]
      %v658 = vperm.slane %v268, 1
      %659 = vmatpush.msra.mxu0 %v657
      %660 = vmatpush.msra.mxu0 %v656
      %661 = vmatpush.msra.mxu0 %v655
      %662 = vmatpush.msra.mxu0 %v654
      %663 = vmatpush.msra.mxu0 %v653
      %664 = vmatpush.msra.mxu0 %v652
      %665 = vmatpush.msra.mxu0 %v651
      %666 = vmatpush.msra.mxu0 %v650
      %667 = vmatpush.msra.mxu0 %v649
      %668 = vmatpush.msra.mxu0 %v648
      %669 = vmatpush.msra.mxu0 %v647
      %670 = vmatpush.msra.mxu0 %v646
      %671 = vmatpush.msra.mxu0 %v645
      %672 = vmatpush.msra.mxu0 %v644
      %673 = vmatpush.msra.mxu0 %v643
      %674 = vmatpush.msra.mxu0 %v642
      %675 = vmatmul.f32.gmra.mxu0 %v626
      %v676 = vpop.f32.mrf.mxu0
      %v677 = vadd.f32 %v658, %v676
      %678 = vmatmul.f32.gmra.mxu0 %v627
      %v679 = vpop.f32.mrf.mxu0
      %v680 = vadd.f32 %v658, %v679
      %681 = vmatmul.f32.gmra.mxu0 %v628
      %v682 = vpop.f32.mrf.mxu0
      %v683 = vadd.f32 %v658, %v682
      %684 = vmatmul.f32.gmra.mxu0 %v629
      %v685 = vpop.f32.mrf.mxu0
      %v686 = vadd.f32 %v658, %v685
      %687 = vmatmul.f32.gmra.mxu0 %v630
      %v688 = vpop.f32.mrf.mxu0
      %v689 = vadd.f32 %v658, %v688
      %690 = vmatmul.f32.gmra.mxu0 %v631
      %v691 = vpop.f32.mrf.mxu0
      %v692 = vadd.f32 %v658, %v691
      %693 = vmatmul.f32.gmra.mxu0 %v632
      %v694 = vpop.f32.mrf.mxu0
      %v695 = vadd.f32 %v658, %v694
      %696 = vmatmul.f32.gmra.mxu0 %v633
      %v697 = vpop.f32.mrf.mxu0
      %v698 = vadd.f32 %v658, %v697
      %699 = vmatmul.f32.gmra.mxu0 %v634
      %v700 = vpop.f32.mrf.mxu0
      %v701 = vadd.f32 %v658, %v700
      %702 = vmatmul.f32.gmra.mxu0 %v635
      %v703 = vpop.f32.mrf.mxu0
      %v704 = vadd.f32 %v658, %v703
      %705 = vmatmul.f32.gmra.mxu0 %v636
      %v706 = vpop.f32.mrf.mxu0
      %v707 = vadd.f32 %v658, %v706
      %708 = vmatmul.f32.gmra.mxu0 %v637
      %v709 = vpop.f32.mrf.mxu0
      %v710 = vadd.f32 %v658, %v709
      %711 = vmatmul.f32.gmra.mxu0 %v638
      %v712 = vpop.f32.mrf.mxu0
      %v713 = vadd.f32 %v658, %v712
      %714 = vmatmul.f32.gmra.mxu0 %v639
      %v715 = vpop.f32.mrf.mxu0
      %v716 = vadd.f32 %v658, %v715
      %717 = vmatmul.f32.gmra.mxu0 %v640
      %v718 = vpop.f32.mrf.mxu0
      %v719 = vadd.f32 %v658, %v718
      %720 = vmatmul.f32.gmra.mxu0 %v641
      %v721 = vpop.f32.mrf.mxu0
      %v722 = vadd.f32 %v658, %v721
      %723 = vdwg.mxu0
      %vm724 = vcmp.ge.f32.partialorder %v677, 0.0
      %vm725 = vcmp.ge.f32.partialorder %v680, 0.0
      %vm726 = vcmp.ge.f32.partialorder %v683, 0.0
      %vm727 = vcmp.ge.f32.partialorder %v686, 0.0
      %vm728 = vcmp.ge.f32.partialorder %v689, 0.0
      %vm729 = vcmp.ge.f32.partialorder %v692, 0.0
      %vm730 = vcmp.ge.f32.partialorder %v695, 0.0
      %vm731 = vcmp.ge.f32.partialorder %v698, 0.0
      %vm732 = vcmp.ge.f32.partialorder %v701, 0.0
      %vm733 = vcmp.ge.f32.partialorder %v704, 0.0
      %vm734 = vcmp.ge.f32.partialorder %v707, 0.0
      %vm735 = vcmp.ge.f32.partialorder %v710, 0.0
      %vm736 = vcmp.ge.f32.partialorder %v713, 0.0
      %vm737 = vcmp.ge.f32.partialorder %v716, 0.0
      %vm738 = vcmp.ge.f32.partialorder %v719, 0.0
      %vm739 = vcmp.ge.f32.partialorder %v722, 0.0
      %v740 = vmul.f32 %v677, 0.02
      %v741 = vmul.f32 %v680, 0.02
      %v742 = vmul.f32 %v683, 0.02
      %v743 = vmul.f32 %v686, 0.02
      %v744 = vmul.f32 %v689, 0.02
      %v745 = vmul.f32 %v692, 0.02
      %v746 = vmul.f32 %v695, 0.02
      %v747 = vmul.f32 %v698, 0.02
      %v748 = vmul.f32 %v701, 0.02
      %v749 = vmul.f32 %v704, 0.02
      %v750 = vmul.f32 %v707, 0.02
      %v751 = vmul.f32 %v710, 0.02
      %v752 = vmul.f32 %v713, 0.02
      %v753 = vmul.f32 %v716, 0.02
      %v754 = vmul.f32 %v719, 0.02
      %v755 = vmul.f32 %v722, 0.02
      %v756 = vsel %vm724, %v677, %v740
      %v757 = vsel %vm725, %v680, %v741
      %v758 = vsel %vm726, %v683, %v742
      %v759 = vsel %vm727, %v686, %v743
      %v760 = vsel %vm728, %v689, %v744
      %v761 = vsel %vm729, %v692, %v745
      %v762 = vsel %vm730, %v695, %v746
      %v763 = vsel %vm731, %v698, %v747
      %v764 = vsel %vm732, %v701, %v748
      %v765 = vsel %vm733, %v704, %v749
      %v766 = vsel %vm734, %v707, %v750
      %v767 = vsel %vm735, %v710, %v751
      %v768 = vsel %vm736, %v713, %v752
      %v769 = vsel %vm737, %v716, %v753
      %v770 = vsel %vm738, %v719, %v754
      %v771 = vsel %vm739, %v722, %v755
      %v772 = vld [vmem:[%s1 + $0x280] sm:$0xff]
      %v773 = vld [vmem:[%s1 + $0x288] sm:$0xff]
      %v774 = vld [vmem:[%s1 + $0x290] sm:$0xff]
      %v775 = vld [vmem:[%s1 + $0x298] sm:$0xff]
      %v776 = vld [vmem:[%s1 + $0x2a0] sm:$0xff]
      %v777 = vld [vmem:[%s1 + $0x2a8] sm:$0xff]
      %v778 = vld [vmem:[%s1 + $0x2b0] sm:$0xff]
      %v779 = vld [vmem:[%s1 + $0x2b8] sm:$0xff]
      %v780 = vld [vmem:[%s1 + $0x2c0] sm:$0xff]
      %v781 = vld [vmem:[%s1 + $0x2c8] sm:$0xff]
      %v782 = vld [vmem:[%s1 + $0x2d0] sm:$0xff]
      %v783 = vld [vmem:[%s1 + $0x2d8] sm:$0xff]
      %v784 = vld [vmem:[%s1 + $0x2e0] sm:$0xff]
      %v785 = vld [vmem:[%s1 + $0x2e8] sm:$0xff]
      %v786 = vld [vmem:[%s1 + $0x2f0] sm:$0xff]
      %v787 = vld [vmem:[%s1 + $0x2f8] sm:$0xff]
      %v788 = vperm.slane %v268, 2
      %789 = vmatpush.msra.mxu0 %v787
      %790 = vmatpush.msra.mxu0 %v786
      %791 = vmatpush.msra.mxu0 %v785
      %792 = vmatpush.msra.mxu0 %v784
      %793 = vmatpush.msra.mxu0 %v783
      %794 = vmatpush.msra.mxu0 %v782
      %795 = vmatpush.msra.mxu0 %v781
      %796 = vmatpush.msra.mxu0 %v780
      %797 = vmatpush.msra.mxu0 %v779
      %798 = vmatpush.msra.mxu0 %v778
      %799 = vmatpush.msra.mxu0 %v777
      %800 = vmatpush.msra.mxu0 %v776
      %801 = vmatpush.msra.mxu0 %v775
      %802 = vmatpush.msra.mxu0 %v774
      %803 = vmatpush.msra.mxu0 %v773
      %804 = vmatpush.msra.mxu0 %v772
      %805 = vmatmul.f32.gmra.mxu0 %v756
      %v806 = vpop.f32.mrf.mxu0
      %v807 = vadd.f32 %v788, %v806
      %808 = vmatmul.f32.gmra.mxu0 %v757
      %v809 = vpop.f32.mrf.mxu0
      %v810 = vadd.f32 %v788, %v809
      %811 = vmatmul.f32.gmra.mxu0 %v758
      %v812 = vpop.f32.mrf.mxu0
      %v813 = vadd.f32 %v788, %v812
      %814 = vmatmul.f32.gmra.mxu0 %v759
      %v815 = vpop.f32.mrf.mxu0
      %v816 = vadd.f32 %v788, %v815
      %817 = vmatmul.f32.gmra.mxu0 %v760
      %v818 = vpop.f32.mrf.mxu0
      %v819 = vadd.f32 %v788, %v818
      %820 = vmatmul.f32.gmra.mxu0 %v761
      %v821 = vpop.f32.mrf.mxu0
      %v822 = vadd.f32 %v788, %v821
      %823 = vmatmul.f32.gmra.mxu0 %v762
      %v824 = vpop.f32.mrf.mxu0
      %v825 = vadd.f32 %v788, %v824
      %826 = vmatmul.f32.gmra.mxu0 %v763
      %v827 = vpop.f32.mrf.mxu0
      %v828 = vadd.f32 %v788, %v827
      %829 = vmatmul.f32.gmra.mxu0 %v764
      %v830 = vpop.f32.mrf.mxu0
      %v831 = vadd.f32 %v788, %v830
      %832 = vmatmul.f32.gmra.mxu0 %v765
      %v833 = vpop.f32.mrf.mxu0
      %v834 = vadd.f32 %v788, %v833
      %835 = vmatmul.f32.gmra.mxu0 %v766
      %v836 = vpop.f32.mrf.mxu0
      %v837 = vadd.f32 %v788, %v836
      %838 = vmatmul.f32.gmra.mxu0 %v767
      %v839 = vpop.f32.mrf.mxu0
      %v840 = vadd.f32 %v788, %v839
      %841 = vmatmul.f32.gmra.mxu0 %v768
      %v842 = vpop.f32.mrf.mxu0
      %v843 = vadd.f32 %v788, %v842
      %844 = vmatmul.f32.gmra.mxu0 %v769
      %v845 = vpop.f32.mrf.mxu0
      %v846 = vadd.f32 %v788, %v845
      %847 = vmatmul.f32.gmra.mxu0 %v770
      %v848 = vpop.f32.mrf.mxu0
      %v849 = vadd.f32 %v788, %v848
      %850 = vmatmul.f32.gmra.mxu0 %v771
      %v851 = vpop.f32.mrf.mxu0
      %v852 = vadd.f32 %v788, %v851
      %853 = vdwg.mxu0
      %vm854 = vcmp.ge.f32.partialorder %v807, 0.0
      %vm855 = vcmp.ge.f32.partialorder %v810, 0.0
      %vm856 = vcmp.ge.f32.partialorder %v813, 0.0
      %vm857 = vcmp.ge.f32.partialorder %v816, 0.0
      %vm858 = vcmp.ge.f32.partialorder %v819, 0.0
      %vm859 = vcmp.ge.f32.partialorder %v822, 0.0
      %vm860 = vcmp.ge.f32.partialorder %v825, 0.0
      %vm861 = vcmp.ge.f32.partialorder %v828, 0.0
      %vm862 = vcmp.ge.f32.partialorder %v831, 0.0
      %vm863 = vcmp.ge.f32.partialorder %v834, 0.0
      %vm864 = vcmp.ge.f32.partialorder %v837, 0.0
      %vm865 = vcmp.ge.f32.partialorder %v840, 0.0
      %vm866 = vcmp.ge.f32.partialorder %v843, 0.0
      %vm867 = vcmp.ge.f32.partialorder %v846, 0.0
      %vm868 = vcmp.ge.f32.partialorder %v849, 0.0
      %vm869 = vcmp.ge.f32.partialorder %v852, 0.0
      %v870 = vmul.f32 %v807, 0.02
      %v871 = vmul.f32 %v810, 0.02
      %v872 = vmul.f32 %v813, 0.02
      %v873 = vmul.f32 %v816, 0.02
      %v874 = vmul.f32 %v819, 0.02
      %v875 = vmul.f32 %v822, 0.02
      %v876 = vmul.f32 %v825, 0.02
      %v877 = vmul.f32 %v828, 0.02
      %v878 = vmul.f32 %v831, 0.02
      %v879 = vmul.f32 %v834, 0.02
      %v880 = vmul.f32 %v837, 0.02
      %v881 = vmul.f32 %v840, 0.02
      %v882 = vmul.f32 %v843, 0.02
      %v883 = vmul.f32 %v846, 0.02
      %v884 = vmul.f32 %v849, 0.02
      %v885 = vmul.f32 %v852, 0.02
      %v886 = vsel %vm854, %v807, %v870
      %v887 = vsel %vm855, %v810, %v871
      %v888 = vsel %vm856, %v813, %v872
      %v889 = vsel %vm857, %v816, %v873
      %v890 = vsel %vm858, %v819, %v874
      %v891 = vsel %vm859, %v822, %v875
      %v892 = vsel %vm860, %v825, %v876
      %v893 = vsel %vm861, %v828, %v877
      %v894 = vsel %vm862, %v831, %v878
      %v895 = vsel %vm863, %v834, %v879
      %v896 = vsel %vm864, %v837, %v880
      %v897 = vsel %vm865, %v840, %v881
      %v898 = vsel %vm866, %v843, %v882
      %v899 = vsel %vm867, %v846, %v883
      %v900 = vsel %vm868, %v849, %v884
      %v901 = vsel %vm869, %v852, %v885
      %v902 = vld [vmem:[%s1 + $0x300] sm:$0xff]
      %v903 = vld [vmem:[%s1 + $0x308] sm:$0xff]
      %v904 = vld [vmem:[%s1 + $0x310] sm:$0xff]
      %v905 = vld [vmem:[%s1 + $0x318] sm:$0xff]
      %v906 = vld [vmem:[%s1 + $0x320] sm:$0xff]
      %v907 = vld [vmem:[%s1 + $0x328] sm:$0xff]
      %v908 = vld [vmem:[%s1 + $0x330] sm:$0xff]
      %v909 = vld [vmem:[%s1 + $0x338] sm:$0xff]
      %v910 = vld [vmem:[%s1 + $0x340] sm:$0xff]
      %v911 = vld [vmem:[%s1 + $0x348] sm:$0xff]
      %v912 = vld [vmem:[%s1 + $0x350] sm:$0xff]
      %v913 = vld [vmem:[%s1 + $0x358] sm:$0xff]
      %v914 = vld [vmem:[%s1 + $0x360] sm:$0xff]
      %v915 = vld [vmem:[%s1 + $0x368] sm:$0xff]
      %v916 = vld [vmem:[%s1 + $0x370] sm:$0xff]
      %v917 = vld [vmem:[%s1 + $0x378] sm:$0xff]
      %v918 = vperm.slane %v268, 3
      %919 = vmatpush.msra.mxu0 %v917
      %920 = vmatpush.msra.mxu0 %v916
      %921 = vmatpush.msra.mxu0 %v915
      %922 = vmatpush.msra.mxu0 %v914
      %923 = vmatpush.msra.mxu0 %v913
      %924 = vmatpush.msra.mxu0 %v912
      %925 = vmatpush.msra.mxu0 %v911
      %926 = vmatpush.msra.mxu0 %v910
      %927 = vmatpush.msra.mxu0 %v909
      %928 = vmatpush.msra.mxu0 %v908
      %929 = vmatpush.msra.mxu0 %v907
      %930 = vmatpush.msra.mxu0 %v906
      %931 = vmatpush.msra.mxu0 %v905
      %932 = vmatpush.msra.mxu0 %v904
      %933 = vmatpush.msra.mxu0 %v903
      %934 = vmatpush.msra.mxu0 %v902
      %935 = vmatmul.f32.gmra.mxu0 %v886
      %v936 = vpop.f32.mrf.mxu0
      %v937 = vadd.f32 %v918, %v936
      %938 = vmatmul.f32.gmra.mxu0 %v887
      %v939 = vpop.f32.mrf.mxu0
      %v940 = vadd.f32 %v918, %v939
      %941 = vmatmul.f32.gmra.mxu0 %v888
      %v942 = vpop.f32.mrf.mxu0
      %v943 = vadd.f32 %v918, %v942
      %944 = vmatmul.f32.gmra.mxu0 %v889
      %v945 = vpop.f32.mrf.mxu0
      %v946 = vadd.f32 %v918, %v945
      %947 = vmatmul.f32.gmra.mxu0 %v890
      %v948 = vpop.f32.mrf.mxu0
      %v949 = vadd.f32 %v918, %v948
      %950 = vmatmul.f32.gmra.mxu0 %v891
      %v951 = vpop.f32.mrf.mxu0
      %v952 = vadd.f32 %v918, %v951
      %953 = vmatmul.f32.gmra.mxu0 %v892
      %v954 = vpop.f32.mrf.mxu0
      %v955 = vadd.f32 %v918, %v954
      %956 = vmatmul.f32.gmra.mxu0 %v893
      %v957 = vpop.f32.mrf.mxu0
      %v958 = vadd.f32 %v918, %v957
      %959 = vmatmul.f32.gmra.mxu0 %v894
      %v960 = vpop.f32.mrf.mxu0
      %v961 = vadd.f32 %v918, %v960
      %962 = vmatmul.f32.gmra.mxu0 %v895
      %v963 = vpop.f32.mrf.mxu0
      %v964 = vadd.f32 %v918, %v963
      %965 = vmatmul.f32.gmra.mxu0 %v896
      %v966 = vpop.f32.mrf.mxu0
      %v967 = vadd.f32 %v918, %v966
      %968 = vmatmul.f32.gmra.mxu0 %v897
      %v969 = vpop.f32.mrf.mxu0
      %v970 = vadd.f32 %v918, %v969
      %971 = vmatmul.f32.gmra.mxu0 %v898
      %v972 = vpop.f32.mrf.mxu0
      %v973 = vadd.f32 %v918, %v972
      %974 = vmatmul.f32.gmra.mxu0 %v899
      %v975 = vpop.f32.mrf.mxu0
      %v976 = vadd.f32 %v918, %v975
      %977 = vmatmul.f32.gmra.mxu0 %v900
      %v978 = vpop.f32.mrf.mxu0
      %v979 = vadd.f32 %v918, %v978
      %980 = vmatmul.f32.gmra.mxu0 %v901
      %v981 = vpop.f32.mrf.mxu0
      %v982 = vadd.f32 %v918, %v981
      %983 = vdwg.mxu0
      %vm984 = vcmp.ge.f32.partialorder %v937, 0.0
      %vm985 = vcmp.ge.f32.partialorder %v940, 0.0
      %vm986 = vcmp.ge.f32.partialorder %v943, 0.0
      %vm987 = vcmp.ge.f32.partialorder %v946, 0.0
      %vm988 = vcmp.ge.f32.partialorder %v949, 0.0
      %vm989 = vcmp.ge.f32.partialorder %v952, 0.0
      %vm990 = vcmp.ge.f32.partialorder %v955, 0.0
      %vm991 = vcmp.ge.f32.partialorder %v958, 0.0
      %vm992 = vcmp.ge.f32.partialorder %v961, 0.0
      %vm993 = vcmp.ge.f32.partialorder %v964, 0.0
      %vm994 = vcmp.ge.f32.partialorder %v967, 0.0
      %vm995 = vcmp.ge.f32.partialorder %v970, 0.0
      %vm996 = vcmp.ge.f32.partialorder %v973, 0.0
      %vm997 = vcmp.ge.f32.partialorder %v976, 0.0
      %vm998 = vcmp.ge.f32.partialorder %v979, 0.0
      %vm999 = vcmp.ge.f32.partialorder %v982, 0.0
      %v1000 = vmul.f32 %v937, 0.02
      %v1001 = vmul.f32 %v940, 0.02
      %v1002 = vmul.f32 %v943, 0.02
      %v1003 = vmul.f32 %v946, 0.02
      %v1004 = vmul.f32 %v949, 0.02
      %v1005 = vmul.f32 %v952, 0.02
      %v1006 = vmul.f32 %v955, 0.02
      %v1007 = vmul.f32 %v958, 0.02
      %v1008 = vmul.f32 %v961, 0.02
      %v1009 = vmul.f32 %v964, 0.02
      %v1010 = vmul.f32 %v967, 0.02
      %v1011 = vmul.f32 %v970, 0.02
      %v1012 = vmul.f32 %v973, 0.02
      %v1013 = vmul.f32 %v976, 0.02
      %v1014 = vmul.f32 %v979, 0.02
      %v1015 = vmul.f32 %v982, 0.02
      %v1016 = vsel %vm984, %v937, %v1000
      %v1017 = vsel %vm985, %v940, %v1001
      %v1018 = vsel %vm986, %v943, %v1002
      %v1019 = vsel %vm987, %v946, %v1003
      %v1020 = vsel %vm988, %v949, %v1004
      %v1021 = vsel %vm989, %v952, %v1005
      %v1022 = vsel %vm990, %v955, %v1006
      %v1023 = vsel %vm991, %v958, %v1007
      %v1024 = vsel %vm992, %v961, %v1008
      %v1025 = vsel %vm993, %v964, %v1009
      %v1026 = vsel %vm994, %v967, %v1010
      %v1027 = vsel %vm995, %v970, %v1011
      %v1028 = vsel %vm996, %v973, %v1012
      %v1029 = vsel %vm997, %v976, %v1013
      %v1030 = vsel %vm998, %v979, %v1014
      %v1031 = vsel %vm999, %v982, %v1015
      %v1032 = vld [vmem:[%s1 + $0x380] sm:$0xff]
      %v1033 = vld [vmem:[%s1 + $0x388] sm:$0xff]
      %v1034 = vld [vmem:[%s1 + $0x390] sm:$0xff]
      %v1035 = vld [vmem:[%s1 + $0x398] sm:$0xff]
      %v1036 = vld [vmem:[%s1 + $0x3a0] sm:$0xff]
      %v1037 = vld [vmem:[%s1 + $0x3a8] sm:$0xff]
      %v1038 = vld [vmem:[%s1 + $0x3b0] sm:$0xff]
      %v1039 = vld [vmem:[%s1 + $0x3b8] sm:$0xff]
      %v1040 = vld [vmem:[%s1 + $0x3c0] sm:$0xff]
      %v1041 = vld [vmem:[%s1 + $0x3c8] sm:$0xff]
      %v1042 = vld [vmem:[%s1 + $0x3d0] sm:$0xff]
      %v1043 = vld [vmem:[%s1 + $0x3d8] sm:$0xff]
      %v1044 = vld [vmem:[%s1 + $0x3e0] sm:$0xff]
      %v1045 = vld [vmem:[%s1 + $0x3e8] sm:$0xff]
      %v1046 = vld [vmem:[%s1 + $0x3f0] sm:$0xff]
      %v1047 = vld [vmem:[%s1 + $0x3f8] sm:$0xff]
      %v1048 = vperm.slane %v268, 4
      %1049 = vmatpush.msra.mxu0 %v1047
      %1050 = vmatpush.msra.mxu0 %v1046
      %1051 = vmatpush.msra.mxu0 %v1045
      %1052 = vmatpush.msra.mxu0 %v1044
      %1053 = vmatpush.msra.mxu0 %v1043
      %1054 = vmatpush.msra.mxu0 %v1042
      %1055 = vmatpush.msra.mxu0 %v1041
      %1056 = vmatpush.msra.mxu0 %v1040
      %1057 = vmatpush.msra.mxu0 %v1039
      %1058 = vmatpush.msra.mxu0 %v1038
      %1059 = vmatpush.msra.mxu0 %v1037
      %1060 = vmatpush.msra.mxu0 %v1036
      %1061 = vmatpush.msra.mxu0 %v1035
      %1062 = vmatpush.msra.mxu0 %v1034
      %1063 = vmatpush.msra.mxu0 %v1033
      %1064 = vmatpush.msra.mxu0 %v1032
      %1065 = vmatmul.f32.gmra.mxu0 %v1016
      %v1066 = vpop.f32.mrf.mxu0
      %v1067 = vadd.f32 %v1048, %v1066
      %1068 = vmatmul.f32.gmra.mxu0 %v1017
      %v1069 = vpop.f32.mrf.mxu0
      %v1070 = vadd.f32 %v1048, %v1069
      %1071 = vmatmul.f32.gmra.mxu0 %v1018
      %v1072 = vpop.f32.mrf.mxu0
      %v1073 = vadd.f32 %v1048, %v1072
      %1074 = vmatmul.f32.gmra.mxu0 %v1019
      %v1075 = vpop.f32.mrf.mxu0
      %v1076 = vadd.f32 %v1048, %v1075
      %1077 = vmatmul.f32.gmra.mxu0 %v1020
      %v1078 = vpop.f32.mrf.mxu0
      %v1079 = vadd.f32 %v1048, %v1078
      %1080 = vmatmul.f32.gmra.mxu0 %v1021
      %v1081 = vpop.f32.mrf.mxu0
      %v1082 = vadd.f32 %v1048, %v1081
      %1083 = vmatmul.f32.gmra.mxu0 %v1022
      %v1084 = vpop.f32.mrf.mxu0
      %v1085 = vadd.f32 %v1048, %v1084
      %1086 = vmatmul.f32.gmra.mxu0 %v1023
      %v1087 = vpop.f32.mrf.mxu0
      %v1088 = vadd.f32 %v1048, %v1087
      %1089 = vmatmul.f32.gmra.mxu0 %v1024
      %v1090 = vpop.f32.mrf.mxu0
      %v1091 = vadd.f32 %v1048, %v1090
      %1092 = vmatmul.f32.gmra.mxu0 %v1025
      %v1093 = vpop.f32.mrf.mxu0
      %v1094 = vadd.f32 %v1048, %v1093
      %1095 = vmatmul.f32.gmra.mxu0 %v1026
      %v1096 = vpop.f32.mrf.mxu0
      %v1097 = vadd.f32 %v1048, %v1096
      %1098 = vmatmul.f32.gmra.mxu0 %v1027
      %v1099 = vpop.f32.mrf.mxu0
      %v1100 = vadd.f32 %v1048, %v1099
      %1101 = vmatmul.f32.gmra.mxu0 %v1028
      %v1102 = vpop.f32.mrf.mxu0
      %v1103 = vadd.f32 %v1048, %v1102
      %1104 = vmatmul.f32.gmra.mxu0 %v1029
      %v1105 = vpop.f32.mrf.mxu0
      %v1106 = vadd.f32 %v1048, %v1105
      %1107 = vmatmul.f32.gmra.mxu0 %v1030
      %v1108 = vpop.f32.mrf.mxu0
      %v1109 = vadd.f32 %v1048, %v1108
      %1110 = vmatmul.f32.gmra.mxu0 %v1031
      %v1111 = vpop.f32.mrf.mxu0
      %v1112 = vadd.f32 %v1048, %v1111
      %1113 = vdwg.mxu0
      %vm1114 = vcmp.ge.f32.partialorder %v1067, 0.0
      %vm1115 = vcmp.ge.f32.partialorder %v1070, 0.0
      %vm1116 = vcmp.ge.f32.partialorder %v1073, 0.0
      %vm1117 = vcmp.ge.f32.partialorder %v1076, 0.0
      %vm1118 = vcmp.ge.f32.partialorder %v1079, 0.0
      %vm1119 = vcmp.ge.f32.partialorder %v1082, 0.0
      %vm1120 = vcmp.ge.f32.partialorder %v1085, 0.0
      %vm1121 = vcmp.ge.f32.partialorder %v1088, 0.0
      %vm1122 = vcmp.ge.f32.partialorder %v1091, 0.0
      %vm1123 = vcmp.ge.f32.partialorder %v1094, 0.0
      %vm1124 = vcmp.ge.f32.partialorder %v1097, 0.0
      %vm1125 = vcmp.ge.f32.partialorder %v1100, 0.0
      %vm1126 = vcmp.ge.f32.partialorder %v1103, 0.0
      %vm1127 = vcmp.ge.f32.partialorder %v1106, 0.0
      %vm1128 = vcmp.ge.f32.partialorder %v1109, 0.0
      %vm1129 = vcmp.ge.f32.partialorder %v1112, 0.0
      %v1130 = vmul.f32 %v1067, 0.02
      %v1131 = vmul.f32 %v1070, 0.02
      %v1132 = vmul.f32 %v1073, 0.02
      %v1133 = vmul.f32 %v1076, 0.02
      %v1134 = vmul.f32 %v1079, 0.02
      %v1135 = vmul.f32 %v1082, 0.02
      %v1136 = vmul.f32 %v1085, 0.02
      %v1137 = vmul.f32 %v1088, 0.02
      %v1138 = vmul.f32 %v1091, 0.02
      %v1139 = vmul.f32 %v1094, 0.02
      %v1140 = vmul.f32 %v1097, 0.02
      %v1141 = vmul.f32 %v1100, 0.02
      %v1142 = vmul.f32 %v1103, 0.02
      %v1143 = vmul.f32 %v1106, 0.02
      %v1144 = vmul.f32 %v1109, 0.02
      %v1145 = vmul.f32 %v1112, 0.02
      %v1146 = vsel %vm1114, %v1067, %v1130
      %v1147 = vsel %vm1115, %v1070, %v1131
      %v1148 = vsel %vm1116, %v1073, %v1132
      %v1149 = vsel %vm1117, %v1076, %v1133
      %v1150 = vsel %vm1118, %v1079, %v1134
      %v1151 = vsel %vm1119, %v1082, %v1135
      %v1152 = vsel %vm1120, %v1085, %v1136
      %v1153 = vsel %vm1121, %v1088, %v1137
      %v1154 = vsel %vm1122, %v1091, %v1138
      %v1155 = vsel %vm1123, %v1094, %v1139
      %v1156 = vsel %vm1124, %v1097, %v1140
      %v1157 = vsel %vm1125, %v1100, %v1141
      %v1158 = vsel %vm1126, %v1103, %v1142
      %v1159 = vsel %vm1127, %v1106, %v1143
      %v1160 = vsel %vm1128, %v1109, %v1144
      %v1161 = vsel %vm1129, %v1112, %v1145
      %v1162 = vld [vmem:[%s1 + $0x408] sm:$0xff]
      %v1163 = vld [vmem:[%s1 + $0x410] sm:$0xff]
      %v1164 = vld [vmem:[%s1 + $0x418] sm:$0xff]
      %v1165 = vld [vmem:[%s1 + $0x420] sm:$0xff]
      %v1166 = vld [vmem:[%s1 + $0x428] sm:$0xff]
      %v1167 = vld [vmem:[%s1 + $0x430] sm:$0xff]
      %v1168 = vld [vmem:[%s1 + $0x438] sm:$0xff]
      %v1169 = vld [vmem:[%s1 + $0x440] sm:$0xff]
      %v1170 = vld [vmem:[%s1 + $0x448] sm:$0xff]
      %v1171 = vld [vmem:[%s1 + $0x450] sm:$0xff]
      %v1172 = vld [vmem:[%s1 + $0x458] sm:$0xff]
      %v1173 = vld [vmem:[%s1 + $0x460] sm:$0xff]
      %v1174 = vld [vmem:[%s1 + $0x468] sm:$0xff]
      %v1175 = vld [vmem:[%s1 + $0x470] sm:$0xff]
      %v1176 = vld [vmem:[%s1 + $0x478] sm:$0xff]
      %v1177 = vld [vmem:[%s1 + $0x480] sm:$0xff]
      %v1178 = vld [vmem:[%s1 + $0x488] sm:$0x1]
      %v1179 = vperm.slane %v1178, 0
      %1180 = vmatpush.msra.mxu0 %v1177
      %1181 = vmatpush.msra.mxu0 %v1176
      %1182 = vmatpush.msra.mxu0 %v1175
      %1183 = vmatpush.msra.mxu0 %v1174
      %1184 = vmatpush.msra.mxu0 %v1173
      %1185 = vmatpush.msra.mxu0 %v1172
      %1186 = vmatpush.msra.mxu0 %v1171
      %1187 = vmatpush.msra.mxu0 %v1170
      %1188 = vmatpush.msra.mxu0 %v1169
      %1189 = vmatpush.msra.mxu0 %v1168
      %1190 = vmatpush.msra.mxu0 %v1167
      %1191 = vmatpush.msra.mxu0 %v1166
      %1192 = vmatpush.msra.mxu0 %v1165
      %1193 = vmatpush.msra.mxu0 %v1164
      %1194 = vmatpush.msra.mxu0 %v1163
      %1195 = vmatpush.msra.mxu0 %v1162
      %1196 = vmatmul.f32.gmra.mxu0 %v1146
      %v1197 = vpop.f32.mrf.mxu0
      %v1198 = vadd.f32 %v1179, %v1197
      %1199 = vmatmul.f32.gmra.mxu0 %v1147
      %v1200 = vpop.f32.mrf.mxu0
      %v1201 = vadd.f32 %v1179, %v1200
      %1202 = vmatmul.f32.gmra.mxu0 %v1148
      %v1203 = vpop.f32.mrf.mxu0
      %v1204 = vadd.f32 %v1179, %v1203
      %1205 = vmatmul.f32.gmra.mxu0 %v1149
      %v1206 = vpop.f32.mrf.mxu0
      %v1207 = vadd.f32 %v1179, %v1206
      %1208 = vmatmul.f32.gmra.mxu0 %v1150
      %v1209 = vpop.f32.mrf.mxu0
      %v1210 = vadd.f32 %v1179, %v1209
      %1211 = vmatmul.f32.gmra.mxu0 %v1151
      %v1212 = vpop.f32.mrf.mxu0
      %v1213 = vadd.f32 %v1179, %v1212
      %1214 = vmatmul.f32.gmra.mxu0 %v1152
      %v1215 = vpop.f32.mrf.mxu0
      %v1216 = vadd.f32 %v1179, %v1215
      %1217 = vmatmul.f32.gmra.mxu0 %v1153
      %v1218 = vpop.f32.mrf.mxu0
      %v1219 = vadd.f32 %v1179, %v1218
      %1220 = vmatmul.f32.gmra.mxu0 %v1154
      %v1221 = vpop.f32.mrf.mxu0
      %v1222 = vadd.f32 %v1179, %v1221
      %1223 = vmatmul.f32.gmra.mxu0 %v1155
      %v1224 = vpop.f32.mrf.mxu0
      %v1225 = vadd.f32 %v1179, %v1224
      %1226 = vmatmul.f32.gmra.mxu0 %v1156
      %v1227 = vpop.f32.mrf.mxu0
      %v1228 = vadd.f32 %v1179, %v1227
      %1229 = vmatmul.f32.gmra.mxu0 %v1157
      %v1230 = vpop.f32.mrf.mxu0
      %v1231 = vadd.f32 %v1179, %v1230
      %1232 = vmatmul.f32.gmra.mxu0 %v1158
      %v1233 = vpop.f32.mrf.mxu0
      %v1234 = vadd.f32 %v1179, %v1233
      %1235 = vmatmul.f32.gmra.mxu0 %v1159
      %v1236 = vpop.f32.mrf.mxu0
      %v1237 = vadd.f32 %v1179, %v1236
      %1238 = vmatmul.f32.gmra.mxu0 %v1160
      %v1239 = vpop.f32.mrf.mxu0
      %v1240 = vadd.f32 %v1179, %v1239
      %1241 = vmatmul.f32.gmra.mxu0 %v1161
      %v1242 = vpop.f32.mrf.mxu0
      %v1243 = vadd.f32 %v1179, %v1242
      %1244 = vdwg.mxu0
      %vm1245 = vcmask 64512
      %v1246 = vsel %vm1245, %v1198, -inf
      %1247 = vmax.xlane.f32.xlu0 %v1246
      %v1248 = vpop.xlane.xlu0 %1247
      %v1249 = vsel %vm1245, %v1201, -inf
      %1250 = vmax.xlane.f32.xlu0 %v1249
      %v1251 = vpop.xlane.xlu0 %1250
      %v1252 = vsel %vm1245, %v1204, -inf
      %1253 = vmax.xlane.f32.xlu0 %v1252
      %v1254 = vpop.xlane.xlu0 %1253
      %v1255 = vsel %vm1245, %v1207, -inf
      %1256 = vmax.xlane.f32.xlu0 %v1255
      %v1257 = vpop.xlane.xlu0 %1256
      %v1258 = vsel %vm1245, %v1210, -inf
      %1259 = vmax.xlane.f32.xlu0 %v1258
      %v1260 = vpop.xlane.xlu0 %1259
      %v1261 = vsel %vm1245, %v1213, -inf
      %1262 = vmax.xlane.f32.xlu0 %v1261
      %v1263 = vpop.xlane.xlu0 %1262
      %v1264 = vsel %vm1245, %v1216, -inf
      %1265 = vmax.xlane.f32.xlu0 %v1264
      %v1266 = vpop.xlane.xlu0 %1265
      %v1267 = vsel %vm1245, %v1219, -inf
      %1268 = vmax.xlane.f32.xlu0 %v1267
      %v1269 = vpop.xlane.xlu0 %1268
      %v1270 = vsel %vm1245, %v1222, -inf
      %1271 = vmax.xlane.f32.xlu0 %v1270
      %v1272 = vpop.xlane.xlu0 %1271
      %v1273 = vsel %vm1245, %v1225, -inf
      %1274 = vmax.xlane.f32.xlu0 %v1273
      %v1275 = vpop.xlane.xlu0 %1274
      %v1276 = vsel %vm1245, %v1228, -inf
      %1277 = vmax.xlane.f32.xlu0 %v1276
      %v1278 = vpop.xlane.xlu0 %1277
      %v1279 = vsel %vm1245, %v1231, -inf
      %1280 = vmax.xlane.f32.xlu0 %v1279
      %v1281 = vpop.xlane.xlu0 %1280
      %v1282 = vsel %vm1245, %v1234, -inf
      %1283 = vmax.xlane.f32.xlu0 %v1282
      %v1284 = vpop.xlane.xlu0 %1283
      %v1285 = vsel %vm1245, %v1237, -inf
      %1286 = vmax.xlane.f32.xlu0 %v1285
      %v1287 = vpop.xlane.xlu0 %1286
      %v1288 = vsel %vm1245, %v1240, -inf
      %1289 = vmax.xlane.f32.xlu0 %v1288
      %v1290 = vpop.xlane.xlu0 %1289
      %v1291 = vsel %vm1245, %v1243, -inf
      %1292 = vmax.xlane.f32.xlu0 %v1291
      %v1293 = vpop.xlane.xlu0 %1292
      %v1294 = vsub.f32 %v1198, %v1248
      %v1295 = vsub.f32 %v1201, %v1251
      %v1296 = vsub.f32 %v1204, %v1254
      %v1297 = vsub.f32 %v1207, %v1257
      %v1298 = vsub.f32 %v1210, %v1260
      %v1299 = vsub.f32 %v1213, %v1263
      %v1300 = vsub.f32 %v1216, %v1266
      %v1301 = vsub.f32 %v1219, %v1269
      %v1302 = vsub.f32 %v1222, %v1272
      %v1303 = vsub.f32 %v1225, %v1275
      %v1304 = vsub.f32 %v1228, %v1278
      %v1305 = vsub.f32 %v1231, %v1281
      %v1306 = vsub.f32 %v1234, %v1284
      %v1307 = vsub.f32 %v1237, %v1287
      %v1308 = vsub.f32 %v1240, %v1290
      %v1309 = vsub.f32 %v1243, %v1293
      %v1310 = vmul.f32 %v1294, 1.442695
      %v1311 = vpow.pop %v1310
      %v1312 = vmul.f32 %v1295, 1.442695
      %v1313 = vpow.pop %v1312
      %v1314 = vmul.f32 %v1296, 1.442695
      %v1315 = vpow.pop %v1314
      %v1316 = vmul.f32 %v1297, 1.442695
      %v1317 = vpow.pop %v1316
      %v1318 = vmul.f32 %v1298, 1.442695
      %v1319 = vpow.pop %v1318
      %v1320 = vmul.f32 %v1299, 1.442695
      %v1321 = vpow.pop %v1320
      %v1322 = vmul.f32 %v1300, 1.442695
      %v1323 = vpow.pop %v1322
      %v1324 = vmul.f32 %v1301, 1.442695
      %v1325 = vpow.pop %v1324
      %v1326 = vmul.f32 %v1302, 1.442695
      %v1327 = vpow.pop %v1326
      %v1328 = vmul.f32 %v1303, 1.442695
      %v1329 = vpow.pop %v1328
      %v1330 = vmul.f32 %v1304, 1.442695
      %v1331 = vpow.pop %v1330
      %v1332 = vmul.f32 %v1305, 1.442695
      %v1333 = vpow.pop %v1332
      %v1334 = vmul.f32 %v1306, 1.442695
      %v1335 = vpow.pop %v1334
      %v1336 = vmul.f32 %v1307, 1.442695
      %v1337 = vpow.pop %v1336
      %v1338 = vmul.f32 %v1308, 1.442695
      %v1339 = vpow.pop %v1338
      %v1340 = vmul.f32 %v1309, 1.442695
      %v1341 = vpow.pop %v1340
      %v1342 = vsel %vm1245, %v1311, 0.0
      %1343 = vadd.xlane.f32.xlu0 %v1342
      %v1344 = vpop.xlane.xlu0 %1343
      %v1345 = vsel %vm1245, %v1313, 0.0
      %1346 = vadd.xlane.f32.xlu0 %v1345
      %v1347 = vpop.xlane.xlu0 %1346
      %v1348 = vsel %vm1245, %v1315, 0.0
      %1349 = vadd.xlane.f32.xlu0 %v1348
      %v1350 = vpop.xlane.xlu0 %1349
      %v1351 = vsel %vm1245, %v1317, 0.0
      %1352 = vadd.xlane.f32.xlu0 %v1351
      %v1353 = vpop.xlane.xlu0 %1352
      %v1354 = vsel %vm1245, %v1319, 0.0
      %1355 = vadd.xlane.f32.xlu0 %v1354
      %v1356 = vpop.xlane.xlu0 %1355
      %v1357 = vsel %vm1245, %v1321, 0.0
      %1358 = vadd.xlane.f32.xlu0 %v1357
      %v1359 = vpop.xlane.xlu0 %1358
      %v1360 = vsel %vm1245, %v1323, 0.0
      %1361 = vadd.xlane.f32.xlu0 %v1360
      %v1362 = vpop.xlane.xlu0 %1361
      %v1363 = vsel %vm1245, %v1325, 0.0
      %1364 = vadd.xlane.f32.xlu0 %v1363
      %v1365 = vpop.xlane.xlu0 %1364
      %v1366 = vsel %vm1245, %v1327, 0.0
      %1367 = vadd.xlane.f32.xlu0 %v1366
      %v1368 = vpop.xlane.xlu0 %1367
      %v1369 = vsel %vm1245, %v1329, 0.0
      %1370 = vadd.xlane.f32.xlu0 %v1369
      %v1371 = vpop.xlane.xlu0 %1370
      %v1372 = vsel %vm1245, %v1331, 0.0
      %1373 = vadd.xlane.f32.xlu0 %v1372
      %v1374 = vpop.xlane.xlu0 %1373
      %v1375 = vsel %vm1245, %v1333, 0.0
      %1376 = vadd.xlane.f32.xlu0 %v1375
      %v1377 = vpop.xlane.xlu0 %1376
      %v1378 = vsel %vm1245, %v1335, 0.0
      %1379 = vadd.xlane.f32.xlu0 %v1378
      %v1380 = vpop.xlane.xlu0 %1379
      %v1381 = vsel %vm1245, %v1337, 0.0
      %1382 = vadd.xlane.f32.xlu0 %v1381
      %v1383 = vpop.xlane.xlu0 %1382
      %v1384 = vsel %vm1245, %v1339, 0.0
      %1385 = vadd.xlane.f32.xlu0 %v1384
      %v1386 = vpop.xlane.xlu0 %1385
      %v1387 = vsel %vm1245, %v1341, 0.0
      %1388 = vadd.xlane.f32.xlu0 %v1387
      %v1389 = vpop.xlane.xlu0 %1388
      %v1390 = vrcp.pop %v1344
      %v1391 = vmul.f32 %v1344, %v1390
      %v1392 = vsub.f32 1.0, %v1391
      %v1393 = vmul.f32 %v1390, %v1392
      %v1394 = vadd.f32 %v1390, %v1393
      %vm1395 = vweird.f32 %v1344
      %vm1396 = vweird.f32 %v1390
      %vm1397 = vmor %vm1395, %vm1396
      %v1398 = vsel %vm1397, %v1390, %v1394
      %v1399 = vand.u32 2147483647, %v1344
      %vm1400 = vcmp.eq.f32.partialorder %v1399, 8.507059e+37
      %v1401 = vand.u32 %v1344, 2147483648
      %v1402 = vor.u32 1.1754944e-38, %v1401
      %v1403 = vsel %vm1400, %v1402, %v1398
      %v1404 = vmul.f32 %v1311, %v1403
      %v1405 = vrcp.pop %v1347
      %v1406 = vmul.f32 %v1347, %v1405
      %v1407 = vsub.f32 1.0, %v1406
      %v1408 = vmul.f32 %v1405, %v1407
      %v1409 = vadd.f32 %v1405, %v1408
      %vm1410 = vweird.f32 %v1347
      %vm1411 = vweird.f32 %v1405
      %vm1412 = vmor %vm1410, %vm1411
      %v1413 = vsel %vm1412, %v1405, %v1409
      %v1414 = vand.u32 2147483647, %v1347
      %vm1415 = vcmp.eq.f32.partialorder %v1414, 8.507059e+37
      %v1416 = vand.u32 %v1347, 2147483648
      %v1417 = vor.u32 1.1754944e-38, %v1416
      %v1418 = vsel %vm1415, %v1417, %v1413
      %v1419 = vmul.f32 %v1313, %v1418
      %v1420 = vrcp.pop %v1350
      %v1421 = vmul.f32 %v1350, %v1420
      %v1422 = vsub.f32 1.0, %v1421
      %v1423 = vmul.f32 %v1420, %v1422
      %v1424 = vadd.f32 %v1420, %v1423
      %vm1425 = vweird.f32 %v1350
      %vm1426 = vweird.f32 %v1420
      %vm1427 = vmor %vm1425, %vm1426
      %v1428 = vsel %vm1427, %v1420, %v1424
      %v1429 = vand.u32 2147483647, %v1350
      %vm1430 = vcmp.eq.f32.partialorder %v1429, 8.507059e+37
      %v1431 = vand.u32 %v1350, 2147483648
      %v1432 = vor.u32 1.1754944e-38, %v1431
      %v1433 = vsel %vm1430, %v1432, %v1428
      %v1434 = vmul.f32 %v1315, %v1433
      %v1435 = vrcp.pop %v1353
      %v1436 = vmul.f32 %v1353, %v1435
      %v1437 = vsub.f32 1.0, %v1436
      %v1438 = vmul.f32 %v1435, %v1437
      %v1439 = vadd.f32 %v1435, %v1438
      %vm1440 = vweird.f32 %v1353
      %vm1441 = vweird.f32 %v1435
      %vm1442 = vmor %vm1440, %vm1441
      %v1443 = vsel %vm1442, %v1435, %v1439
      %v1444 = vand.u32 2147483647, %v1353
      %vm1445 = vcmp.eq.f32.partialorder %v1444, 8.507059e+37
      %v1446 = vand.u32 %v1353, 2147483648
      %v1447 = vor.u32 1.1754944e-38, %v1446
      %v1448 = vsel %vm1445, %v1447, %v1443
      %v1449 = vmul.f32 %v1317, %v1448
      %v1450 = vrcp.pop %v1356
      %v1451 = vmul.f32 %v1356, %v1450
      %v1452 = vsub.f32 1.0, %v1451
      %v1453 = vmul.f32 %v1450, %v1452
      %v1454 = vadd.f32 %v1450, %v1453
      %vm1455 = vweird.f32 %v1356
      %vm1456 = vweird.f32 %v1450
      %vm1457 = vmor %vm1455, %vm1456
      %v1458 = vsel %vm1457, %v1450, %v1454
      %v1459 = vand.u32 2147483647, %v1356
      %vm1460 = vcmp.eq.f32.partialorder %v1459, 8.507059e+37
      %v1461 = vand.u32 %v1356, 2147483648
      %v1462 = vor.u32 1.1754944e-38, %v1461
      %v1463 = vsel %vm1460, %v1462, %v1458
      %v1464 = vmul.f32 %v1319, %v1463
      %v1465 = vrcp.pop %v1359
      %v1466 = vmul.f32 %v1359, %v1465
      %v1467 = vsub.f32 1.0, %v1466
      %v1468 = vmul.f32 %v1465, %v1467
      %v1469 = vadd.f32 %v1465, %v1468
      %vm1470 = vweird.f32 %v1359
      %vm1471 = vweird.f32 %v1465
      %vm1472 = vmor %vm1470, %vm1471
      %v1473 = vsel %vm1472, %v1465, %v1469
      %v1474 = vand.u32 2147483647, %v1359
      %vm1475 = vcmp.eq.f32.partialorder %v1474, 8.507059e+37
      %v1476 = vand.u32 %v1359, 2147483648
      %v1477 = vor.u32 1.1754944e-38, %v1476
      %v1478 = vsel %vm1475, %v1477, %v1473
      %v1479 = vmul.f32 %v1321, %v1478
      %v1480 = vrcp.pop %v1362
      %v1481 = vmul.f32 %v1362, %v1480
      %v1482 = vsub.f32 1.0, %v1481
      %v1483 = vmul.f32 %v1480, %v1482
      %v1484 = vadd.f32 %v1480, %v1483
      %vm1485 = vweird.f32 %v1362
      %vm1486 = vweird.f32 %v1480
      %vm1487 = vmor %vm1485, %vm1486
      %v1488 = vsel %vm1487, %v1480, %v1484
      %v1489 = vand.u32 2147483647, %v1362
      %vm1490 = vcmp.eq.f32.partialorder %v1489, 8.507059e+37
      %v1491 = vand.u32 %v1362, 2147483648
      %v1492 = vor.u32 1.1754944e-38, %v1491
      %v1493 = vsel %vm1490, %v1492, %v1488
      %v1494 = vmul.f32 %v1323, %v1493
      %v1495 = vrcp.pop %v1365
      %v1496 = vmul.f32 %v1365, %v1495
      %v1497 = vsub.f32 1.0, %v1496
      %v1498 = vmul.f32 %v1495, %v1497
      %v1499 = vadd.f32 %v1495, %v1498
      %vm1500 = vweird.f32 %v1365
      %vm1501 = vweird.f32 %v1495
      %vm1502 = vmor %vm1500, %vm1501
      %v1503 = vsel %vm1502, %v1495, %v1499
      %v1504 = vand.u32 2147483647, %v1365
      %vm1505 = vcmp.eq.f32.partialorder %v1504, 8.507059e+37
      %v1506 = vand.u32 %v1365, 2147483648
      %v1507 = vor.u32 1.1754944e-38, %v1506
      %v1508 = vsel %vm1505, %v1507, %v1503
      %v1509 = vmul.f32 %v1325, %v1508
      %v1510 = vrcp.pop %v1368
      %v1511 = vmul.f32 %v1368, %v1510
      %v1512 = vsub.f32 1.0, %v1511
      %v1513 = vmul.f32 %v1510, %v1512
      %v1514 = vadd.f32 %v1510, %v1513
      %vm1515 = vweird.f32 %v1368
      %vm1516 = vweird.f32 %v1510
      %vm1517 = vmor %vm1515, %vm1516
      %v1518 = vsel %vm1517, %v1510, %v1514
      %v1519 = vand.u32 2147483647, %v1368
      %vm1520 = vcmp.eq.f32.partialorder %v1519, 8.507059e+37
      %v1521 = vand.u32 %v1368, 2147483648
      %v1522 = vor.u32 1.1754944e-38, %v1521
      %v1523 = vsel %vm1520, %v1522, %v1518
      %v1524 = vmul.f32 %v1327, %v1523
      %v1525 = vrcp.pop %v1371
      %v1526 = vmul.f32 %v1371, %v1525
      %v1527 = vsub.f32 1.0, %v1526
      %v1528 = vmul.f32 %v1525, %v1527
      %v1529 = vadd.f32 %v1525, %v1528
      %vm1530 = vweird.f32 %v1371
      %vm1531 = vweird.f32 %v1525
      %vm1532 = vmor %vm1530, %vm1531
      %v1533 = vsel %vm1532, %v1525, %v1529
      %v1534 = vand.u32 2147483647, %v1371
      %vm1535 = vcmp.eq.f32.partialorder %v1534, 8.507059e+37
      %v1536 = vand.u32 %v1371, 2147483648
      %v1537 = vor.u32 1.1754944e-38, %v1536
      %v1538 = vsel %vm1535, %v1537, %v1533
      %v1539 = vmul.f32 %v1329, %v1538
      %v1540 = vrcp.pop %v1374
      %v1541 = vmul.f32 %v1374, %v1540
      %v1542 = vsub.f32 1.0, %v1541
      %v1543 = vmul.f32 %v1540, %v1542
      %v1544 = vadd.f32 %v1540, %v1543
      %vm1545 = vweird.f32 %v1374
      %vm1546 = vweird.f32 %v1540
      %vm1547 = vmor %vm1545, %vm1546
      %v1548 = vsel %vm1547, %v1540, %v1544
      %v1549 = vand.u32 2147483647, %v1374
      %vm1550 = vcmp.eq.f32.partialorder %v1549, 8.507059e+37
      %v1551 = vand.u32 %v1374, 2147483648
      %v1552 = vor.u32 1.1754944e-38, %v1551
      %v1553 = vsel %vm1550, %v1552, %v1548
      %v1554 = vmul.f32 %v1331, %v1553
      %v1555 = vrcp.pop %v1377
      %v1556 = vmul.f32 %v1377, %v1555
      %v1557 = vsub.f32 1.0, %v1556
      %v1558 = vmul.f32 %v1555, %v1557
      %v1559 = vadd.f32 %v1555, %v1558
      %vm1560 = vweird.f32 %v1377
      %vm1561 = vweird.f32 %v1555
      %vm1562 = vmor %vm1560, %vm1561
      %v1563 = vsel %vm1562, %v1555, %v1559
      %v1564 = vand.u32 2147483647, %v1377
      %vm1565 = vcmp.eq.f32.partialorder %v1564, 8.507059e+37
      %v1566 = vand.u32 %v1377, 2147483648
      %v1567 = vor.u32 1.1754944e-38, %v1566
      %v1568 = vsel %vm1565, %v1567, %v1563
      %v1569 = vmul.f32 %v1333, %v1568
      %v1570 = vrcp.pop %v1380
      %v1571 = vmul.f32 %v1380, %v1570
      %v1572 = vsub.f32 1.0, %v1571
      %v1573 = vmul.f32 %v1570, %v1572
      %v1574 = vadd.f32 %v1570, %v1573
      %vm1575 = vweird.f32 %v1380
      %vm1576 = vweird.f32 %v1570
      %vm1577 = vmor %vm1575, %vm1576
      %v1578 = vsel %vm1577, %v1570, %v1574
      %v1579 = vand.u32 2147483647, %v1380
      %vm1580 = vcmp.eq.f32.partialorder %v1579, 8.507059e+37
      %v1581 = vand.u32 %v1380, 2147483648
      %v1582 = vor.u32 1.1754944e-38, %v1581
      %v1583 = vsel %vm1580, %v1582, %v1578
      %v1584 = vmul.f32 %v1335, %v1583
      %v1585 = vrcp.pop %v1383
      %v1586 = vmul.f32 %v1383, %v1585
      %v1587 = vsub.f32 1.0, %v1586
      %v1588 = vmul.f32 %v1585, %v1587
      %v1589 = vadd.f32 %v1585, %v1588
      %vm1590 = vweird.f32 %v1383
      %vm1591 = vweird.f32 %v1585
      %vm1592 = vmor %vm1590, %vm1591
      %v1593 = vsel %vm1592, %v1585, %v1589
      %v1594 = vand.u32 2147483647, %v1383
      %vm1595 = vcmp.eq.f32.partialorder %v1594, 8.507059e+37
      %v1596 = vand.u32 %v1383, 2147483648
      %v1597 = vor.u32 1.1754944e-38, %v1596
      %v1598 = vsel %vm1595, %v1597, %v1593
      %v1599 = vmul.f32 %v1337, %v1598
      %v1600 = vrcp.pop %v1386
      %v1601 = vmul.f32 %v1386, %v1600
      %v1602 = vsub.f32 1.0, %v1601
      %v1603 = vmul.f32 %v1600, %v1602
      %v1604 = vadd.f32 %v1600, %v1603
      %vm1605 = vweird.f32 %v1386
      %vm1606 = vweird.f32 %v1600
      %vm1607 = vmor %vm1605, %vm1606
      %v1608 = vsel %vm1607, %v1600, %v1604
      %v1609 = vand.u32 2147483647, %v1386
      %vm1610 = vcmp.eq.f32.partialorder %v1609, 8.507059e+37
      %v1611 = vand.u32 %v1386, 2147483648
      %v1612 = vor.u32 1.1754944e-38, %v1611
      %v1613 = vsel %vm1610, %v1612, %v1608
      %v1614 = vmul.f32 %v1339, %v1613
      %v1615 = vrcp.pop %v1389
      %v1616 = vmul.f32 %v1389, %v1615
      %v1617 = vsub.f32 1.0, %v1616
      %v1618 = vmul.f32 %v1615, %v1617
      %v1619 = vadd.f32 %v1615, %v1618
      %vm1620 = vweird.f32 %v1389
      %vm1621 = vweird.f32 %v1615
      %vm1622 = vmor %vm1620, %vm1621
      %v1623 = vsel %vm1622, %v1615, %v1619
      %v1624 = vand.u32 2147483647, %v1389
      %vm1625 = vcmp.eq.f32.partialorder %v1624, 8.507059e+37
      %v1626 = vand.u32 %v1389, 2147483648
      %v1627 = vor.u32 1.1754944e-38, %v1626
      %v1628 = vsel %vm1625, %v1627, %v1623
      %v1629 = vmul.f32 %v1341, %v1628
      %v1630 = vld [vmem:[%s2] sm:$0xff]
      %v1631 = vld [vmem:[%s2 + $0x8] sm:$0xff]
      %v1632 = vld [vmem:[%s2 + $0x10] sm:$0xff]
      %v1633 = vld [vmem:[%s2 + $0x18] sm:$0xff]
      %v1635 = vsel %vm1245, %v1404, 0
      %v1638 = vsel %vm1245, %v1419, 0
      %v1641 = vsel %vm1245, %v1434, 0
      %v1644 = vsel %vm1245, %v1449, 0
      %v1647 = vsel %vm1245, %v1464, 0
      %v1650 = vsel %vm1245, %v1479, 0
      %v1653 = vsel %vm1245, %v1494, 0
      %v1656 = vsel %vm1245, %v1509, 0
      %v1659 = vsel %vm1245, %v1524, 0
      %v1662 = vsel %vm1245, %v1539, 0
      %v1665 = vsel %vm1245, %v1554, 0
      %v1668 = vsel %vm1245, %v1569, 0
      %v1671 = vsel %vm1245, %v1584, 0
      %v1674 = vsel %vm1245, %v1599, 0
      %v1677 = vsel %vm1245, %v1614, 0
      %v1680 = vsel %vm1245, %v1629, 0
      %1682 = vmatpush.msra.mxu0 0.0
      %1683 = vmatpush.msra.mxu0 0.0
      %1684 = vmatpush.msra.mxu0 0.0
      %1685 = vmatpush.msra.mxu0 0.0
      %1686 = vmatpush.msra.mxu0 0.0
      %1687 = vmatpush.msra.mxu0 0.0
      %1688 = vmatpush.msra.mxu0 0.0
      %1689 = vmatpush.msra.mxu0 0.0
      %1690 = vmatpush.msra.mxu0 0.0
      %1691 = vmatpush.msra.mxu0 0.0
      %1692 = vmatpush.msra.mxu0 0.0
      %1693 = vmatpush.msra.mxu0 0.0
      %1694 = vmatpush.msra.mxu0 0.0
      %1695 = vmatpush.msra.mxu0 0.0
      %1696 = vmatpush.msra.mxu0 0.0
      %1697 = vmatpush.msra.mxu0 %v1630
      %1698 = vmatmul.f32.gmra.mxu0 %v1635
      %v1699 = vpop.f32.mrf.mxu0
      %v1700 = vadd.f32 0.0, %v1699
      %1701 = vmatmul.f32.gmra.mxu0 %v1638
      %v1702 = vpop.f32.mrf.mxu0
      %v1703 = vadd.f32 0.0, %v1702
      %1704 = vmatmul.f32.gmra.mxu0 %v1641
      %v1705 = vpop.f32.mrf.mxu0
      %v1706 = vadd.f32 0.0, %v1705
      %1707 = vmatmul.f32.gmra.mxu0 %v1644
      %v1708 = vpop.f32.mrf.mxu0
      %v1709 = vadd.f32 0.0, %v1708
      %1710 = vmatmul.f32.gmra.mxu0 %v1647
      %v1711 = vpop.f32.mrf.mxu0
      %v1712 = vadd.f32 0.0, %v1711
      %1713 = vmatmul.f32.gmra.mxu0 %v1650
      %v1714 = vpop.f32.mrf.mxu0
      %v1715 = vadd.f32 0.0, %v1714
      %1716 = vmatmul.f32.gmra.mxu0 %v1653
      %v1717 = vpop.f32.mrf.mxu0
      %v1718 = vadd.f32 0.0, %v1717
      %1719 = vmatmul.f32.gmra.mxu0 %v1656
      %v1720 = vpop.f32.mrf.mxu0
      %v1721 = vadd.f32 0.0, %v1720
      %1722 = vmatmul.f32.gmra.mxu0 %v1659
      %v1723 = vpop.f32.mrf.mxu0
      %v1724 = vadd.f32 0.0, %v1723
      %1725 = vmatmul.f32.gmra.mxu0 %v1662
      %v1726 = vpop.f32.mrf.mxu0
      %v1727 = vadd.f32 0.0, %v1726
      %1728 = vmatmul.f32.gmra.mxu0 %v1665
      %v1729 = vpop.f32.mrf.mxu0
      %v1730 = vadd.f32 0.0, %v1729
      %1731 = vmatmul.f32.gmra.mxu0 %v1668
      %v1732 = vpop.f32.mrf.mxu0
      %v1733 = vadd.f32 0.0, %v1732
      %1734 = vmatmul.f32.gmra.mxu0 %v1671
      %v1735 = vpop.f32.mrf.mxu0
      %v1736 = vadd.f32 0.0, %v1735
      %1737 = vmatmul.f32.gmra.mxu0 %v1674
      %v1738 = vpop.f32.mrf.mxu0
      %v1739 = vadd.f32 0.0, %v1738
      %1740 = vmatmul.f32.gmra.mxu0 %v1677
      %v1741 = vpop.f32.mrf.mxu0
      %v1742 = vadd.f32 0.0, %v1741
      %1743 = vmatmul.f32.gmra.mxu0 %v1680
      %v1744 = vpop.f32.mrf.mxu0
      %v1745 = vadd.f32 0.0, %v1744
      %1746 = vdwg.mxu0
      %1747 = vmatpush.msra.mxu0 0.0
      %1748 = vmatpush.msra.mxu0 0.0
      %1749 = vmatpush.msra.mxu0 0.0
      %1750 = vmatpush.msra.mxu0 0.0
      %1751 = vmatpush.msra.mxu0 0.0
      %1752 = vmatpush.msra.mxu0 0.0
      %1753 = vmatpush.msra.mxu0 0.0
      %1754 = vmatpush.msra.mxu0 0.0
      %1755 = vmatpush.msra.mxu0 0.0
      %1756 = vmatpush.msra.mxu0 0.0
      %1757 = vmatpush.msra.mxu0 0.0
      %1758 = vmatpush.msra.mxu0 0.0
      %1759 = vmatpush.msra.mxu0 0.0
      %1760 = vmatpush.msra.mxu0 0.0
      %1761 = vmatpush.msra.mxu0 0.0
      %1762 = vmatpush.msra.mxu0 %v1631
      %1763 = vmatmul.f32.gmra.mxu0 %v1635
      %v1764 = vpop.f32.mrf.mxu0
      %v1765 = vadd.f32 0.0, %v1764
      %1766 = vmatmul.f32.gmra.mxu0 %v1638
      %v1767 = vpop.f32.mrf.mxu0
      %v1768 = vadd.f32 0.0, %v1767
      %1769 = vmatmul.f32.gmra.mxu0 %v1641
      %v1770 = vpop.f32.mrf.mxu0
      %v1771 = vadd.f32 0.0, %v1770
      %1772 = vmatmul.f32.gmra.mxu0 %v1644
      %v1773 = vpop.f32.mrf.mxu0
      %v1774 = vadd.f32 0.0, %v1773
      %1775 = vmatmul.f32.gmra.mxu0 %v1647
      %v1776 = vpop.f32.mrf.mxu0
      %v1777 = vadd.f32 0.0, %v1776
      %1778 = vmatmul.f32.gmra.mxu0 %v1650
      %v1779 = vpop.f32.mrf.mxu0
      %v1780 = vadd.f32 0.0, %v1779
      %1781 = vmatmul.f32.gmra.mxu0 %v1653
      %v1782 = vpop.f32.mrf.mxu0
      %v1783 = vadd.f32 0.0, %v1782
      %1784 = vmatmul.f32.gmra.mxu0 %v1656
      %v1785 = vpop.f32.mrf.mxu0
      %v1786 = vadd.f32 0.0, %v1785
      %1787 = vmatmul.f32.gmra.mxu0 %v1659
      %v1788 = vpop.f32.mrf.mxu0
      %v1789 = vadd.f32 0.0, %v1788
      %1790 = vmatmul.f32.gmra.mxu0 %v1662
      %v1791 = vpop.f32.mrf.mxu0
      %v1792 = vadd.f32 0.0, %v1791
      %1793 = vmatmul.f32.gmra.mxu0 %v1665
      %v1794 = vpop.f32.mrf.mxu0
      %v1795 = vadd.f32 0.0, %v1794
      %1796 = vmatmul.f32.gmra.mxu0 %v1668
      %v1797 = vpop.f32.mrf.mxu0
      %v1798 = vadd.f32 0.0, %v1797
      %1799 = vmatmul.f32.gmra.mxu0 %v1671
      %v1800 = vpop.f32.mrf.mxu0
      %v1801 = vadd.f32 0.0, %v1800
      %1802 = vmatmul.f32.gmra.mxu0 %v1674
      %v1803 = vpop.f32.mrf.mxu0
      %v1804 = vadd.f32 0.0, %v1803
      %1805 = vmatmul.f32.gmra.mxu0 %v1677
      %v1806 = vpop.f32.mrf.mxu0
      %v1807 = vadd.f32 0.0, %v1806
      %1808 = vmatmul.f32.gmra.mxu0 %v1680
      %v1809 = vpop.f32.mrf.mxu0
      %v1810 = vadd.f32 0.0, %v1809
      %1811 = vdwg.mxu0
      %1812 = vmatpush.msra.mxu0 0.0
      %1813 = vmatpush.msra.mxu0 0.0
      %1814 = vmatpush.msra.mxu0 0.0
      %1815 = vmatpush.msra.mxu0 0.0
      %1816 = vmatpush.msra.mxu0 0.0
      %1817 = vmatpush.msra.mxu0 0.0
      %1818 = vmatpush.msra.mxu0 0.0
      %1819 = vmatpush.msra.mxu0 0.0
      %1820 = vmatpush.msra.mxu0 0.0
      %1821 = vmatpush.msra.mxu0 0.0
      %1822 = vmatpush.msra.mxu0 0.0
      %1823 = vmatpush.msra.mxu0 0.0
      %1824 = vmatpush.msra.mxu0 0.0
      %1825 = vmatpush.msra.mxu0 0.0
      %1826 = vmatpush.msra.mxu0 0.0
      %1827 = vmatpush.msra.mxu0 %v1632
      %1828 = vmatmul.f32.gmra.mxu0 %v1635
      %v1829 = vpop.f32.mrf.mxu0
      %v1830 = vadd.f32 0.0, %v1829
      %1831 = vmatmul.f32.gmra.mxu0 %v1638
      %v1832 = vpop.f32.mrf.mxu0
      %v1833 = vadd.f32 0.0, %v1832
      %1834 = vmatmul.f32.gmra.mxu0 %v1641
      %v1835 = vpop.f32.mrf.mxu0
      %v1836 = vadd.f32 0.0, %v1835
      %1837 = vmatmul.f32.gmra.mxu0 %v1644
      %v1838 = vpop.f32.mrf.mxu0
      %v1839 = vadd.f32 0.0, %v1838
      %1840 = vmatmul.f32.gmra.mxu0 %v1647
      %v1841 = vpop.f32.mrf.mxu0
      %v1842 = vadd.f32 0.0, %v1841
      %1843 = vmatmul.f32.gmra.mxu0 %v1650
      %v1844 = vpop.f32.mrf.mxu0
      %v1845 = vadd.f32 0.0, %v1844
      %1846 = vmatmul.f32.gmra.mxu0 %v1653
      %v1847 = vpop.f32.mrf.mxu0
      %v1848 = vadd.f32 0.0, %v1847
      %1849 = vmatmul.f32.gmra.mxu0 %v1656
      %v1850 = vpop.f32.mrf.mxu0
      %v1851 = vadd.f32 0.0, %v1850
      %1852 = vmatmul.f32.gmra.mxu0 %v1659
      %v1853 = vpop.f32.mrf.mxu0
      %v1854 = vadd.f32 0.0, %v1853
      %1855 = vmatmul.f32.gmra.mxu0 %v1662
      %v1856 = vpop.f32.mrf.mxu0
      %v1857 = vadd.f32 0.0, %v1856
      %1858 = vmatmul.f32.gmra.mxu0 %v1665
      %v1859 = vpop.f32.mrf.mxu0
      %v1860 = vadd.f32 0.0, %v1859
      %1861 = vmatmul.f32.gmra.mxu0 %v1668
      %v1862 = vpop.f32.mrf.mxu0
      %v1863 = vadd.f32 0.0, %v1862
      %1864 = vmatmul.f32.gmra.mxu0 %v1671
      %v1865 = vpop.f32.mrf.mxu0
      %v1866 = vadd.f32 0.0, %v1865
      %1867 = vmatmul.f32.gmra.mxu0 %v1674
      %v1868 = vpop.f32.mrf.mxu0
      %v1869 = vadd.f32 0.0, %v1868
      %1870 = vmatmul.f32.gmra.mxu0 %v1677
      %v1871 = vpop.f32.mrf.mxu0
      %v1872 = vadd.f32 0.0, %v1871
      %1873 = vmatmul.f32.gmra.mxu0 %v1680
      %v1874 = vpop.f32.mrf.mxu0
      %v1875 = vadd.f32 0.0, %v1874
      %1876 = vdwg.mxu0
      %1877 = vmatpush.msra.mxu0 0.0
      %1878 = vmatpush.msra.mxu0 0.0
      %1879 = vmatpush.msra.mxu0 0.0
      %1880 = vmatpush.msra.mxu0 0.0
      %1881 = vmatpush.msra.mxu0 0.0
      %1882 = vmatpush.msra.mxu0 0.0
      %1883 = vmatpush.msra.mxu0 0.0
      %1884 = vmatpush.msra.mxu0 0.0
      %1885 = vmatpush.msra.mxu0 0.0
      %1886 = vmatpush.msra.mxu0 0.0
      %1887 = vmatpush.msra.mxu0 0.0
      %1888 = vmatpush.msra.mxu0 0.0
      %1889 = vmatpush.msra.mxu0 0.0
      %1890 = vmatpush.msra.mxu0 0.0
      %1891 = vmatpush.msra.mxu0 0.0
      %1892 = vmatpush.msra.mxu0 %v1633
      %1893 = vmatmul.f32.gmra.mxu0 %v1635
      %v1894 = vpop.f32.mrf.mxu0
      %v1895 = vadd.f32 0.0, %v1894
      %1896 = vmatmul.f32.gmra.mxu0 %v1638
      %v1897 = vpop.f32.mrf.mxu0
      %v1898 = vadd.f32 0.0, %v1897
      %1899 = vmatmul.f32.gmra.mxu0 %v1641
      %v1900 = vpop.f32.mrf.mxu0
      %v1901 = vadd.f32 0.0, %v1900
      %1902 = vmatmul.f32.gmra.mxu0 %v1644
      %v1903 = vpop.f32.mrf.mxu0
      %v1904 = vadd.f32 0.0, %v1903
      %1905 = vmatmul.f32.gmra.mxu0 %v1647
      %v1906 = vpop.f32.mrf.mxu0
      %v1907 = vadd.f32 0.0, %v1906
      %1908 = vmatmul.f32.gmra.mxu0 %v1650
      %v1909 = vpop.f32.mrf.mxu0
      %v1910 = vadd.f32 0.0, %v1909
      %1911 = vmatmul.f32.gmra.mxu0 %v1653
      %v1912 = vpop.f32.mrf.mxu0
      %v1913 = vadd.f32 0.0, %v1912
      %1914 = vmatmul.f32.gmra.mxu0 %v1656
      %v1915 = vpop.f32.mrf.mxu0
      %v1916 = vadd.f32 0.0, %v1915
      %1917 = vmatmul.f32.gmra.mxu0 %v1659
      %v1918 = vpop.f32.mrf.mxu0
      %v1919 = vadd.f32 0.0, %v1918
      %1920 = vmatmul.f32.gmra.mxu0 %v1662
      %v1921 = vpop.f32.mrf.mxu0
      %v1922 = vadd.f32 0.0, %v1921
      %1923 = vmatmul.f32.gmra.mxu0 %v1665
      %v1924 = vpop.f32.mrf.mxu0
      %v1925 = vadd.f32 0.0, %v1924
      %1926 = vmatmul.f32.gmra.mxu0 %v1668
      %v1927 = vpop.f32.mrf.mxu0
      %v1928 = vadd.f32 0.0, %v1927
      %1929 = vmatmul.f32.gmra.mxu0 %v1671
      %v1930 = vpop.f32.mrf.mxu0
      %v1931 = vadd.f32 0.0, %v1930
      %1932 = vmatmul.f32.gmra.mxu0 %v1674
      %v1933 = vpop.f32.mrf.mxu0
      %v1934 = vadd.f32 0.0, %v1933
      %1935 = vmatmul.f32.gmra.mxu0 %v1677
      %v1936 = vpop.f32.mrf.mxu0
      %v1937 = vadd.f32 0.0, %v1936
      %1938 = vmatmul.f32.gmra.mxu0 %v1680
      %v1939 = vpop.f32.mrf.mxu0
      %v1940 = vadd.f32 0.0, %v1939
      %1941 = vdwg.mxu0
      %v1942 = vmul.f32 %v1700, %v204
      %v1943 = vmul.f32 %v1765, %v205
      %v1944 = vmul.f32 %v1830, %v206
      %v1945 = vmul.f32 %v1895, %v207
      %v1946 = vmul.f32 %v1703, %v208
      %v1947 = vmul.f32 %v1768, %v209
      %v1948 = vmul.f32 %v1833, %v210
      %v1949 = vmul.f32 %v1898, %v211
      %v1950 = vmul.f32 %v1706, %v212
      %v1951 = vmul.f32 %v1771, %v213
      %v1952 = vmul.f32 %v1836, %v214
      %v1953 = vmul.f32 %v1901, %v215
      %v1954 = vmul.f32 %v1709, %v216
      %v1955 = vmul.f32 %v1774, %v217
      %v1956 = vmul.f32 %v1839, %v218
      %v1957 = vmul.f32 %v1904, %v219
      %v1958 = vmul.f32 %v1712, %v220
      %v1959 = vmul.f32 %v1777, %v221
      %v1960 = vmul.f32 %v1842, %v222
      %v1961 = vmul.f32 %v1907, %v223
      %v1962 = vmul.f32 %v1715, %v224
      %v1963 = vmul.f32 %v1780, %v225
      %v1964 = vmul.f32 %v1845, %v226
      %v1965 = vmul.f32 %v1910, %v227
      %v1966 = vmul.f32 %v1718, %v228
      %v1967 = vmul.f32 %v1783, %v229
      %v1968 = vmul.f32 %v1848, %v230
      %v1969 = vmul.f32 %v1913, %v231
      %v1970 = vmul.f32 %v1721, %v232
      %v1971 = vmul.f32 %v1786, %v233
      %v1972 = vmul.f32 %v1851, %v234
      %v1973 = vmul.f32 %v1916, %v235
      %v1974 = vmul.f32 %v1724, %v236
      %v1975 = vmul.f32 %v1789, %v237
      %v1976 = vmul.f32 %v1854, %v238
      %v1977 = vmul.f32 %v1919, %v239
      %v1978 = vmul.f32 %v1727, %v240
      %v1979 = vmul.f32 %v1792, %v241
      %v1980 = vmul.f32 %v1857, %v242
      %v1981 = vmul.f32 %v1922, %v243
      %v1982 = vmul.f32 %v1730, %v244
      %v1983 = vmul.f32 %v1795, %v245
      %v1984 = vmul.f32 %v1860, %v246
      %v1985 = vmul.f32 %v1925, %v247
      %v1986 = vmul.f32 %v1733, %v248
      %v1987 = vmul.f32 %v1798, %v249
      %v1988 = vmul.f32 %v1863, %v250
      %v1989 = vmul.f32 %v1928, %v251
      %v1990 = vmul.f32 %v1736, %v252
      %v1991 = vmul.f32 %v1801, %v253
      %v1992 = vmul.f32 %v1866, %v254
      %v1993 = vmul.f32 %v1931, %v255
      %v1994 = vmul.f32 %v1739, %v256
      %v1995 = vmul.f32 %v1804, %v257
      %v1996 = vmul.f32 %v1869, %v258
      %v1997 = vmul.f32 %v1934, %v259
      %v1998 = vmul.f32 %v1742, %v260
      %v1999 = vmul.f32 %v1807, %v261
      %v2000 = vmul.f32 %v1872, %v262
      %v2001 = vmul.f32 %v1937, %v263
      %v2002 = vmul.f32 %v1745, %v264
      %v2003 = vmul.f32 %v1810, %v265
      %v2004 = vmul.f32 %v1875, %v266
      %v2005 = vmul.f32 %v1940, %v267
      %v2006 = vld [vmem:[%s3] sm:$0xff]
      %v2007 = vld [vmem:[%s3 + $0x8] sm:$0xff]
      %v2008 = vld [vmem:[%s3 + $0x10] sm:$0xff]
      %v2009 = vld [vmem:[%s3 + $0x18] sm:$0xff]
      %v2010 = vld [vmem:[%s3 + $0x20] sm:$0xff]
      %v2011 = vld [vmem:[%s3 + $0x28] sm:$0xff]
      %v2012 = vld [vmem:[%s3 + $0x30] sm:$0xff]
      %v2013 = vld [vmem:[%s3 + $0x38] sm:$0xff]
      %v2014 = vld [vmem:[%s3 + $0x40] sm:$0xff]
      %v2015 = vld [vmem:[%s3 + $0x48] sm:$0xff]
      %v2016 = vld [vmem:[%s3 + $0x50] sm:$0xff]
      %v2017 = vld [vmem:[%s3 + $0x58] sm:$0xff]
      %v2018 = vld [vmem:[%s3 + $0x60] sm:$0xff]
      %v2019 = vld [vmem:[%s3 + $0x68] sm:$0xff]
      %v2020 = vld [vmem:[%s3 + $0x70] sm:$0xff]
      %v2021 = vld [vmem:[%s3 + $0x78] sm:$0xff]
      %v2022 = vld [vmem:[%s3 + $0x80] sm:$0xff]
      %v2023 = vld [vmem:[%s3 + $0x88] sm:$0xff]
      %v2024 = vld [vmem:[%s3 + $0x90] sm:$0xff]
      %v2025 = vld [vmem:[%s3 + $0x98] sm:$0xff]
      %v2026 = vld [vmem:[%s3 + $0xa0] sm:$0xff]
      %v2027 = vld [vmem:[%s3 + $0xa8] sm:$0xff]
      %v2028 = vld [vmem:[%s3 + $0xb0] sm:$0xff]
      %v2029 = vld [vmem:[%s3 + $0xb8] sm:$0xff]
      %v2030 = vld [vmem:[%s3 + $0xc0] sm:$0xff]
      %v2031 = vld [vmem:[%s3 + $0xc8] sm:$0xff]
      %v2032 = vld [vmem:[%s3 + $0xd0] sm:$0xff]
      %v2033 = vld [vmem:[%s3 + $0xd8] sm:$0xff]
      %v2034 = vld [vmem:[%s3 + $0xe0] sm:$0xff]
      %v2035 = vld [vmem:[%s3 + $0xe8] sm:$0xff]
      %v2036 = vld [vmem:[%s3 + $0xf0] sm:$0xff]
      %v2037 = vld [vmem:[%s3 + $0xf8] sm:$0xff]
      %v2038 = vld [vmem:[%s3 + $0x100] sm:$0xff]
      %v2039 = vld [vmem:[%s3 + $0x108] sm:$0xff]
      %v2040 = vld [vmem:[%s3 + $0x110] sm:$0xff]
      %v2041 = vld [vmem:[%s3 + $0x118] sm:$0xff]
      %v2042 = vld [vmem:[%s3 + $0x120] sm:$0xff]
      %v2043 = vld [vmem:[%s3 + $0x128] sm:$0xff]
      %v2044 = vld [vmem:[%s3 + $0x130] sm:$0xff]
      %v2045 = vld [vmem:[%s3 + $0x138] sm:$0xff]
      %v2046 = vld [vmem:[%s3 + $0x140] sm:$0xff]
      %v2047 = vld [vmem:[%s3 + $0x148] sm:$0xff]
      %v2048 = vld [vmem:[%s3 + $0x150] sm:$0xff]
      %v2049 = vld [vmem:[%s3 + $0x158] sm:$0xff]
      %v2050 = vld [vmem:[%s3 + $0x160] sm:$0xff]
      %v2051 = vld [vmem:[%s3 + $0x168] sm:$0xff]
      %v2052 = vld [vmem:[%s3 + $0x170] sm:$0xff]
      %v2053 = vld [vmem:[%s3 + $0x178] sm:$0xff]
      %v2054 = vld [vmem:[%s3 + $0x180] sm:$0xff]
      %v2055 = vld [vmem:[%s3 + $0x188] sm:$0xff]
      %v2056 = vld [vmem:[%s3 + $0x190] sm:$0xff]
      %v2057 = vld [vmem:[%s3 + $0x198] sm:$0xff]
      %v2058 = vld [vmem:[%s3 + $0x1a0] sm:$0xff]
      %v2059 = vld [vmem:[%s3 + $0x1a8] sm:$0xff]
      %v2060 = vld [vmem:[%s3 + $0x1b0] sm:$0xff]
      %v2061 = vld [vmem:[%s3 + $0x1b8] sm:$0xff]
      %v2062 = vld [vmem:[%s3 + $0x1c0] sm:$0xff]
      %v2063 = vld [vmem:[%s3 + $0x1c8] sm:$0xff]
      %v2064 = vld [vmem:[%s3 + $0x1d0] sm:$0xff]
      %v2065 = vld [vmem:[%s3 + $0x1d8] sm:$0xff]
      %v2066 = vld [vmem:[%s3 + $0x1e0] sm:$0xff]
      %v2067 = vld [vmem:[%s3 + $0x1e8] sm:$0xff]
      %v2068 = vld [vmem:[%s3 + $0x1f0] sm:$0xff]
      %v2069 = vld [vmem:[%s3 + $0x1f8] sm:$0xff]
      %2070 = vmatpush.msra.mxu0 %v2021
      %2071 = vmatpush.msra.mxu0 %v2020
      %2072 = vmatpush.msra.mxu0 %v2019
      %2073 = vmatpush.msra.mxu0 %v2018
      %2074 = vmatpush.msra.mxu0 %v2017
      %2075 = vmatpush.msra.mxu0 %v2016
      %2076 = vmatpush.msra.mxu0 %v2015
      %2077 = vmatpush.msra.mxu0 %v2014
      %2078 = vmatpush.msra.mxu0 %v2013
      %2079 = vmatpush.msra.mxu0 %v2012
      %2080 = vmatpush.msra.mxu0 %v2011
      %2081 = vmatpush.msra.mxu0 %v2010
      %2082 = vmatpush.msra.mxu0 %v2009
      %2083 = vmatpush.msra.mxu0 %v2008
      %2084 = vmatpush.msra.mxu0 %v2007
      %2085 = vmatpush.msra.mxu0 %v2006
      %2086 = vmatmul.f32.gmra.mxu0 %v1942
      %v2087 = vpop.f32.mrf.mxu0
      %v2088 = vadd.f32 0.0, %v2087
      %2089 = vmatmul.f32.gmra.mxu0 %v1946
      %v2090 = vpop.f32.mrf.mxu0
      %v2091 = vadd.f32 0.0, %v2090
      %2092 = vmatmul.f32.gmra.mxu0 %v1950
      %v2093 = vpop.f32.mrf.mxu0
      %v2094 = vadd.f32 0.0, %v2093
      %2095 = vmatmul.f32.gmra.mxu0 %v1954
      %v2096 = vpop.f32.mrf.mxu0
      %v2097 = vadd.f32 0.0, %v2096
      %2098 = vmatmul.f32.gmra.mxu0 %v1958
      %v2099 = vpop.f32.mrf.mxu0
      %v2100 = vadd.f32 0.0, %v2099
      %2101 = vmatmul.f32.gmra.mxu0 %v1962
      %v2102 = vpop.f32.mrf.mxu0
      %v2103 = vadd.f32 0.0, %v2102
      %2104 = vmatmul.f32.gmra.mxu0 %v1966
      %v2105 = vpop.f32.mrf.mxu0
      %v2106 = vadd.f32 0.0, %v2105
      %2107 = vmatmul.f32.gmra.mxu0 %v1970
      %v2108 = vpop.f32.mrf.mxu0
      %v2109 = vadd.f32 0.0, %v2108
      %2110 = vmatmul.f32.gmra.mxu0 %v1974
      %v2111 = vpop.f32.mrf.mxu0
      %v2112 = vadd.f32 0.0, %v2111
      %2113 = vmatmul.f32.gmra.mxu0 %v1978
      %v2114 = vpop.f32.mrf.mxu0
      %v2115 = vadd.f32 0.0, %v2114
      %2116 = vmatmul.f32.gmra.mxu0 %v1982
      %v2117 = vpop.f32.mrf.mxu0
      %v2118 = vadd.f32 0.0, %v2117
      %2119 = vmatmul.f32.gmra.mxu0 %v1986
      %v2120 = vpop.f32.mrf.mxu0
      %v2121 = vadd.f32 0.0, %v2120
      %2122 = vmatmul.f32.gmra.mxu0 %v1990
      %v2123 = vpop.f32.mrf.mxu0
      %v2124 = vadd.f32 0.0, %v2123
      %2125 = vmatmul.f32.gmra.mxu0 %v1994
      %v2126 = vpop.f32.mrf.mxu0
      %v2127 = vadd.f32 0.0, %v2126
      %2128 = vmatmul.f32.gmra.mxu0 %v1998
      %v2129 = vpop.f32.mrf.mxu0
      %v2130 = vadd.f32 0.0, %v2129
      %2131 = vmatmul.f32.gmra.mxu0 %v2002
      %v2132 = vpop.f32.mrf.mxu0
      %v2133 = vadd.f32 0.0, %v2132
      %2134 = vdwg.mxu0
      %2135 = vmatpush.msra.mxu0 %v2037
      %2136 = vmatpush.msra.mxu0 %v2036
      %2137 = vmatpush.msra.mxu0 %v2035
      %2138 = vmatpush.msra.mxu0 %v2034
      %2139 = vmatpush.msra.mxu0 %v2033
      %2140 = vmatpush.msra.mxu0 %v2032
      %2141 = vmatpush.msra.mxu0 %v2031
      %2142 = vmatpush.msra.mxu0 %v2030
      %2143 = vmatpush.msra.mxu0 %v2029
      %2144 = vmatpush.msra.mxu0 %v2028
      %2145 = vmatpush.msra.mxu0 %v2027
      %2146 = vmatpush.msra.mxu0 %v2026
      %2147 = vmatpush.msra.mxu0 %v2025
      %2148 = vmatpush.msra.mxu0 %v2024
      %2149 = vmatpush.msra.mxu0 %v2023
      %2150 = vmatpush.msra.mxu0 %v2022
      %2151 = vmatmul.f32.gmra.mxu0 %v1943
      %v2152 = vpop.f32.mrf.mxu0
      %v2153 = vadd.f32 %v2088, %v2152
      %2154 = vmatmul.f32.gmra.mxu0 %v1947
      %v2155 = vpop.f32.mrf.mxu0
      %v2156 = vadd.f32 %v2091, %v2155
      %2157 = vmatmul.f32.gmra.mxu0 %v1951
      %v2158 = vpop.f32.mrf.mxu0
      %v2159 = vadd.f32 %v2094, %v2158
      %2160 = vmatmul.f32.gmra.mxu0 %v1955
      %v2161 = vpop.f32.mrf.mxu0
      %v2162 = vadd.f32 %v2097, %v2161
      %2163 = vmatmul.f32.gmra.mxu0 %v1959
      %v2164 = vpop.f32.mrf.mxu0
      %v2165 = vadd.f32 %v2100, %v2164
      %2166 = vmatmul.f32.gmra.mxu0 %v1963
      %v2167 = vpop.f32.mrf.mxu0
      %v2168 = vadd.f32 %v2103, %v2167
      %2169 = vmatmul.f32.gmra.mxu0 %v1967
      %v2170 = vpop.f32.mrf.mxu0
      %v2171 = vadd.f32 %v2106, %v2170
      %2172 = vmatmul.f32.gmra.mxu0 %v1971
      %v2173 = vpop.f32.mrf.mxu0
      %v2174 = vadd.f32 %v2109, %v2173
      %2175 = vmatmul.f32.gmra.mxu0 %v1975
      %v2176 = vpop.f32.mrf.mxu0
      %v2177 = vadd.f32 %v2112, %v2176
      %2178 = vmatmul.f32.gmra.mxu0 %v1979
      %v2179 = vpop.f32.mrf.mxu0
      %v2180 = vadd.f32 %v2115, %v2179
      %2181 = vmatmul.f32.gmra.mxu0 %v1983
      %v2182 = vpop.f32.mrf.mxu0
      %v2183 = vadd.f32 %v2118, %v2182
      %2184 = vmatmul.f32.gmra.mxu0 %v1987
      %v2185 = vpop.f32.mrf.mxu0
      %v2186 = vadd.f32 %v2121, %v2185
      %2187 = vmatmul.f32.gmra.mxu0 %v1991
      %v2188 = vpop.f32.mrf.mxu0
      %v2189 = vadd.f32 %v2124, %v2188
      %2190 = vmatmul.f32.gmra.mxu0 %v1995
      %v2191 = vpop.f32.mrf.mxu0
      %v2192 = vadd.f32 %v2127, %v2191
      %2193 = vmatmul.f32.gmra.mxu0 %v1999
      %v2194 = vpop.f32.mrf.mxu0
      %v2195 = vadd.f32 %v2130, %v2194
      %2196 = vmatmul.f32.gmra.mxu0 %v2003
      %v2197 = vpop.f32.mrf.mxu0
      %v2198 = vadd.f32 %v2133, %v2197
      %2199 = vdwg.mxu0
      %2200 = vmatpush.msra.mxu0 %v2053
      %2201 = vmatpush.msra.mxu0 %v2052
      %2202 = vmatpush.msra.mxu0 %v2051
      %2203 = vmatpush.msra.mxu0 %v2050
      %2204 = vmatpush.msra.mxu0 %v2049
      %2205 = vmatpush.msra.mxu0 %v2048
      %2206 = vmatpush.msra.mxu0 %v2047
      %2207 = vmatpush.msra.mxu0 %v2046
      %2208 = vmatpush.msra.mxu0 %v2045
      %2209 = vmatpush.msra.mxu0 %v2044
      %2210 = vmatpush.msra.mxu0 %v2043
      %2211 = vmatpush.msra.mxu0 %v2042
      %2212 = vmatpush.msra.mxu0 %v2041
      %2213 = vmatpush.msra.mxu0 %v2040
      %2214 = vmatpush.msra.mxu0 %v2039
      %2215 = vmatpush.msra.mxu0 %v2038
      %2216 = vmatmul.f32.gmra.mxu0 %v1944
      %v2217 = vpop.f32.mrf.mxu0
      %v2218 = vadd.f32 %v2153, %v2217
      %2219 = vmatmul.f32.gmra.mxu0 %v1948
      %v2220 = vpop.f32.mrf.mxu0
      %v2221 = vadd.f32 %v2156, %v2220
      %2222 = vmatmul.f32.gmra.mxu0 %v1952
      %v2223 = vpop.f32.mrf.mxu0
      %v2224 = vadd.f32 %v2159, %v2223
      %2225 = vmatmul.f32.gmra.mxu0 %v1956
      %v2226 = vpop.f32.mrf.mxu0
      %v2227 = vadd.f32 %v2162, %v2226
      %2228 = vmatmul.f32.gmra.mxu0 %v1960
      %v2229 = vpop.f32.mrf.mxu0
      %v2230 = vadd.f32 %v2165, %v2229
      %2231 = vmatmul.f32.gmra.mxu0 %v1964
      %v2232 = vpop.f32.mrf.mxu0
      %v2233 = vadd.f32 %v2168, %v2232
      %2234 = vmatmul.f32.gmra.mxu0 %v1968
      %v2235 = vpop.f32.mrf.mxu0
      %v2236 = vadd.f32 %v2171, %v2235
      %2237 = vmatmul.f32.gmra.mxu0 %v1972
      %v2238 = vpop.f32.mrf.mxu0
      %v2239 = vadd.f32 %v2174, %v2238
      %2240 = vmatmul.f32.gmra.mxu0 %v1976
      %v2241 = vpop.f32.mrf.mxu0
      %v2242 = vadd.f32 %v2177, %v2241
      %2243 = vmatmul.f32.gmra.mxu0 %v1980
      %v2244 = vpop.f32.mrf.mxu0
      %v2245 = vadd.f32 %v2180, %v2244
      %2246 = vmatmul.f32.gmra.mxu0 %v1984
      %v2247 = vpop.f32.mrf.mxu0
      %v2248 = vadd.f32 %v2183, %v2247
      %2249 = vmatmul.f32.gmra.mxu0 %v1988
      %v2250 = vpop.f32.mrf.mxu0
      %v2251 = vadd.f32 %v2186, %v2250
      %2252 = vmatmul.f32.gmra.mxu0 %v1992
      %v2253 = vpop.f32.mrf.mxu0
      %v2254 = vadd.f32 %v2189, %v2253
      %2255 = vmatmul.f32.gmra.mxu0 %v1996
      %v2256 = vpop.f32.mrf.mxu0
      %v2257 = vadd.f32 %v2192, %v2256
      %2258 = vmatmul.f32.gmra.mxu0 %v2000
      %v2259 = vpop.f32.mrf.mxu0
      %v2260 = vadd.f32 %v2195, %v2259
      %2261 = vmatmul.f32.gmra.mxu0 %v2004
      %v2262 = vpop.f32.mrf.mxu0
      %v2263 = vadd.f32 %v2198, %v2262
      %2264 = vdwg.mxu0
      %2265 = vmatpush.msra.mxu0 %v2069
      %2266 = vmatpush.msra.mxu0 %v2068
      %2267 = vmatpush.msra.mxu0 %v2067
      %2268 = vmatpush.msra.mxu0 %v2066
      %2269 = vmatpush.msra.mxu0 %v2065
      %2270 = vmatpush.msra.mxu0 %v2064
      %2271 = vmatpush.msra.mxu0 %v2063
      %2272 = vmatpush.msra.mxu0 %v2062
      %2273 = vmatpush.msra.mxu0 %v2061
      %2274 = vmatpush.msra.mxu0 %v2060
      %2275 = vmatpush.msra.mxu0 %v2059
      %2276 = vmatpush.msra.mxu0 %v2058
      %2277 = vmatpush.msra.mxu0 %v2057
      %2278 = vmatpush.msra.mxu0 %v2056
      %2279 = vmatpush.msra.mxu0 %v2055
      %2280 = vmatpush.msra.mxu0 %v2054
      %2281 = vmatmul.f32.gmra.mxu0 %v1945
      %v2282 = vpop.f32.mrf.mxu0
      %v2283 = vadd.f32 %v2218, %v2282
      %2284 = vmatmul.f32.gmra.mxu0 %v1949
      %v2285 = vpop.f32.mrf.mxu0
      %v2286 = vadd.f32 %v2221, %v2285
      %2287 = vmatmul.f32.gmra.mxu0 %v1953
      %v2288 = vpop.f32.mrf.mxu0
      %v2289 = vadd.f32 %v2224, %v2288
      %2290 = vmatmul.f32.gmra.mxu0 %v1957
      %v2291 = vpop.f32.mrf.mxu0
      %v2292 = vadd.f32 %v2227, %v2291
      %2293 = vmatmul.f32.gmra.mxu0 %v1961
      %v2294 = vpop.f32.mrf.mxu0
      %v2295 = vadd.f32 %v2230, %v2294
      %2296 = vmatmul.f32.gmra.mxu0 %v1965
      %v2297 = vpop.f32.mrf.mxu0
      %v2298 = vadd.f32 %v2233, %v2297
      %2299 = vmatmul.f32.gmra.mxu0 %v1969
      %v2300 = vpop.f32.mrf.mxu0
      %v2301 = vadd.f32 %v2236, %v2300
      %2302 = vmatmul.f32.gmra.mxu0 %v1973
      %v2303 = vpop.f32.mrf.mxu0
      %v2304 = vadd.f32 %v2239, %v2303
      %2305 = vmatmul.f32.gmra.mxu0 %v1977
      %v2306 = vpop.f32.mrf.mxu0
      %v2307 = vadd.f32 %v2242, %v2306
      %2308 = vmatmul.f32.gmra.mxu0 %v1981
      %v2309 = vpop.f32.mrf.mxu0
      %v2310 = vadd.f32 %v2245, %v2309
      %2311 = vmatmul.f32.gmra.mxu0 %v1985
      %v2312 = vpop.f32.mrf.mxu0
      %v2313 = vadd.f32 %v2248, %v2312
      %2314 = vmatmul.f32.gmra.mxu0 %v1989
      %v2315 = vpop.f32.mrf.mxu0
      %v2316 = vadd.f32 %v2251, %v2315
      %2317 = vmatmul.f32.gmra.mxu0 %v1993
      %v2318 = vpop.f32.mrf.mxu0
      %v2319 = vadd.f32 %v2254, %v2318
      %2320 = vmatmul.f32.gmra.mxu0 %v1997
      %v2321 = vpop.f32.mrf.mxu0
      %v2322 = vadd.f32 %v2257, %v2321
      %2323 = vmatmul.f32.gmra.mxu0 %v2001
      %v2324 = vpop.f32.mrf.mxu0
      %v2325 = vadd.f32 %v2260, %v2324
      %2326 = vmatmul.f32.gmra.mxu0 %v2005
      %v2327 = vpop.f32.mrf.mxu0
      %v2328 = vadd.f32 %v2263, %v2327
      %2329 = vdwg.mxu0
      %vm2330 = vcmask 523264
      %2331 = vst.msk [vmem:[%s202] sm:$0xff] %vm2330, %v2283
      %2332 = vst.msk [vmem:[%s202 + $0x8] sm:$0xff] %vm2330, %v2286
      %2333 = vst.msk [vmem:[%s202 + $0x10] sm:$0xff] %vm2330, %v2289
      %2334 = vst.msk [vmem:[%s202 + $0x18] sm:$0xff] %vm2330, %v2292
      %2335 = vst.msk [vmem:[%s202 + $0x20] sm:$0xff] %vm2330, %v2295
      %2336 = vst.msk [vmem:[%s202 + $0x28] sm:$0xff] %vm2330, %v2298
      %2337 = vst.msk [vmem:[%s202 + $0x30] sm:$0xff] %vm2330, %v2301
      %2338 = vst.msk [vmem:[%s202 + $0x38] sm:$0xff] %vm2330, %v2304
      %2339 = vst.msk [vmem:[%s202 + $0x40] sm:$0xff] %vm2330, %v2307
      %2340 = vst.msk [vmem:[%s202 + $0x48] sm:$0xff] %vm2330, %v2310
      %2341 = vst.msk [vmem:[%s202 + $0x50] sm:$0xff] %vm2330, %v2313
      %2342 = vst.msk [vmem:[%s202 + $0x58] sm:$0xff] %vm2330, %v2316
      %2343 = vst.msk [vmem:[%s202 + $0x60] sm:$0xff] %vm2330, %v2319
      %2344 = vst.msk [vmem:[%s202 + $0x68] sm:$0xff] %vm2330, %v2322
      %2345 = vst.msk [vmem:[%s202 + $0x70] sm:$0xff] %vm2330, %v2325
      %2346 = vst.msk [vmem:[%s202 + $0x78] sm:$0xff] %vm2330, %v2328
      %s2347 = smul.u32 16, %s15
      %p2348 = scmp.lt.s32.totalorder %s2347, 31
      %s2349 = scalar_select %p2348, %s2347, 31
      %s2350 = smul.addr %s2349, 8
      %s2351 = scalar_lea.vmem %s4, %s2350
      // Predicated region
      $region37: #{audio_att_forward.1} parent=35 // pred_check
        %p2352 = pneg %p122
      $region38: #{audio_att_forward.1} parent=35 // pred_check_branch
        %2354 = sbr.rel (%p2352) target = $region40
      $region39: #{audio_att_forward.1} parent=35 // pred_region
        %s2355 = smul.u32 16, %s15
      $region40: #{audio_att_forward.1} parent=35 // pred_fallthru
        _
    $region36: #{audio_att_forward.1} parent=5 // pred_fallthru
      _
    %p2356 = scmp.le.s32.totalorder 2, %s10
    // Predicated region
    $region41: #{audio_att_forward.1} parent=5 // pred_check
      %p2357 = pneg %p2356
    $region42: #{audio_att_forward.1} parent=5 // pred_check_branch
      %2359 = sbr.rel (%p2357) target = $region44
    $region43: #{audio_att_forward.1} parent=5 // pred_region
      %s2360 = ssub.s32 %s10, 2
      // Predicated region
      $region45: #{audio_att_forward.1} parent=43 // pred_check
        %p2361 = pneg %p128
      $region46: #{audio_att_forward.1} parent=43 // pred_check_branch
        %2363 = sbr.rel (%p2361) target = $region48
      $region47: #{audio_att_forward.1} parent=43 // pred_region
        %s2364 = smul.u32 16, %s16
        %p2365 = scmp.lt.s32.totalorder %s2364, 31
        %s2366 = scalar_select %p2365, %s2364, 31
        %s2367 = smul.addr %s2366, 8
        %s2368 = scalar_lea.vmem %s4, %s2367
      $region48: #{audio_att_forward.1} parent=43 // pred_fallthru
        _
    $region44: #{audio_att_forward.1} parent=5 // pred_fallthru
      _
  $region6: #{audio_att_forward.1} parent=0 // loop_footer
    %s14 = sadd.s32 1, %s10
  $region7: #{audio_att_forward.1} parent=0 // loop_footer_branch
    %9 = sbr.rel target = $region3
  $region8: #{audio_att_forward.1} parent=0 // loop_exit
    _

</llo_original>
